<compile_context>
chip_gen: v7x
topology: tpu7x:2x2x1
jax: 0.10.0
libtpu: 0.0.40
codegen_flags: <defaults>
</compile_context>

<pallas_src>
import functools

import jax
import jax.numpy as jnp
from jax.experimental import pallas as pl
from jax.experimental.pallas import tpu as pltpu


def _round_up(x, m):
    return (x + m - 1) // m * m


def _conv2d_rows_kernel(x_ref, w_ref, b_ref, o_ref, *, wp, kh_sz, kw_sz, halo):
    """One (image, row-tile) grid step of the spatially-flattened conv.

    x_ref : (1, R_in, Cin)        bf16 flattened padded image (resident per image)
    w_ref : (KH*KW, Cin, Coutp)   bf16 per-tap weights, Cout lane-padded to 128
    b_ref : (1, Coutp)            f32 bias, lane-padded
    o_ref : (1, TM, Coutp)        f32 output rows of this tile (lane-dense store)
    """
    tm = o_ref.shape[1]
    t = pl.program_id(1)
    start = pl.multiple_of(t * tm, 8)
    # Single 8-aligned dynamic-start window load: TM output rows + tap halo.
    win = x_ref[0, pl.ds(start, tm + halo), :]              # (TM + halo, Cin)

    acc = None
    for kh in range(kh_sz):
        for kw in range(kw_sz):
            s = kh * wp + kw            # flat row shift of tap (kh, kw)
            # win[s:s+TM] is a pure sublane shift of a narrow bf16 slab (XLU);
            # no 2-D window gather / reshape relayout.  One MXU matmul per tap
            # with f32 accumulation.
            tap = jnp.dot(win[s:s + tm, :], w_ref[kh * kw_sz + kw],
                          preferred_element_type=jnp.float32)
            acc = tap if acc is None else acc + tap
    acc = acc + b_ref[...]                                   # broadcast bias add
    o_ref[0] = acc.astype(o_ref.dtype)


def norm_conv2d(x_nchw, weight, bias, *, padding=1, norm="weight_norm",
                weight_g=None, stride=1, dilation=1, groups=1,
                compute_dtype=jnp.bfloat16, row_tile=128):
    """Forward of NormConv2d (nn.Conv2d + optional weight_norm), NCHW in/out.

    x_nchw  : (N, Cin, H, W)
    weight  : (Cout, Cin, KH, KW)   (the "v" tensor when norm == 'weight_norm')
    bias    : (Cout,)
    weight_g: (Cout,) weight_norm gains (required iff norm == 'weight_norm')
    """
    if stride not in (1, (1, 1)) or dilation not in (1, (1, 1)) or groups != 1:
        raise NotImplementedError(
            "norm_conv2d kernel supports stride=1, dilation=1, groups=1 only")

    if norm == "weight_norm":
        if weight_g is None:
            raise ValueError("weight_g is required for norm='weight_norm'")
        v = weight.astype(jnp.float32)
        # No epsilon, matching torch.nn.utils.weight_norm (an all-zero output
        # channel of v yields inf/NaN in both implementations).
        v_norm = jnp.sqrt(jnp.sum(v * v, axis=(1, 2, 3), keepdims=True))
        g = weight_g.reshape(-1, 1, 1, 1).astype(jnp.float32)
        w_eff = g * v / v_norm
    else:
        # 'none' and other norms that do not reparametrize the conv weight.
        # TODO(synk): spectral_norm power-iteration is training-time state; at
        # init sigma comes from random u/v, so the raw weight is used here.
        w_eff = weight.astype(jnp.float32)

    N, Cin, H, W = x_nchw.shape
    Cout, _, KH, KW = w_eff.shape
    if isinstance(padding, (tuple, list)):
        ph, pw = int(padding[0]), int(padding[1])
    else:
        ph = pw = int(padding)
    Hp, Wp = H + 2 * ph, W + 2 * pw
    Hout, Wout = Hp - KH + 1, Wp - KW + 1

    Coutp = _round_up(Cout, 128)                 # lane-dense acc / output stores
    halo = _round_up((KH - 1) * Wp + (KW - 1), 8)
    R0 = Hp * Wp                                 # flattened padded spatial rows
    TM = min(_round_up(row_tile, 8), _round_up(R0, 8))
    num_tiles = -(-R0 // TM)
    R_in = num_tiles * TM + halo                 # rows incl. tail halo padding

    # NCHW -> NHWC -> flatten spatial rows, zero-pad tail, cast for the MXU.
    # TODO(synk): for an NHWC-native surrounding model these transposes and the
    # HBM-side zero pad disappear (fold the halo into the kernel instead).
    x_nhwc = jnp.transpose(x_nchw, (0, 2, 3, 1))
    x_pad = jnp.pad(x_nhwc, ((0, 0), (ph, ph), (pw, pw), (0, 0)))
    x_flat = x_pad.reshape(N, R0, Cin)
    x_flat = jnp.pad(x_flat, ((0, 0), (0, R_in - R0), (0, 0)))
    x_flat = x_flat.astype(compute_dtype)

    # (Cout, Cin, KH, KW) -> (KH*KW, Cin, Coutp): per-tap matrices, lane-padded.
    w_taps = jnp.transpose(w_eff, (2, 3, 1, 0)).reshape(KH * KW, Cin, Cout)
    w_taps = jnp.pad(w_taps, ((0, 0), (0, 0), (0, Coutp - Cout)))
    w_taps = w_taps.astype(compute_dtype)
    b_pad = jnp.pad(bias.astype(jnp.float32), (0, Coutp - Cout))[None, :]

    kernel = functools.partial(_conv2d_rows_kernel, wp=Wp, kh_sz=KH, kw_sz=KW,
                               halo=halo)
    out_flat = pl.pallas_call(
        kernel,
        out_shape=jax.ShapeDtypeStruct((N, num_tiles * TM, Coutp), x_nchw.dtype),
        grid_spec=pltpu.PrefetchScalarGridSpec(
            num_scalar_prefetch=0,
            grid=(N, num_tiles),
            in_specs=[
                # Full flattened image; block index only changes with n, so it
                # stays resident across the row-tile axis (no re-DMA per tile).
                pl.BlockSpec((1, R_in, Cin), lambda n, t: (n, 0, 0)),
                # Grid-invariant weights / bias (few KB).
                pl.BlockSpec((KH * KW, Cin, Coutp), lambda n, t: (0, 0, 0)),
                pl.BlockSpec((1, Coutp), lambda n, t: (0, 0)),
            ],
            out_specs=pl.BlockSpec((1, TM, Coutp), lambda n, t: (n, t, 0)),
        ),
        compiler_params=pltpu.CompilerParams(
            dimension_semantics=("parallel", "parallel"),
            vmem_limit_bytes=32 * 1024 * 1024,
        ),
    )(x_flat, w_taps, b_pad)

    # Drop lane / row padding, un-flatten, NHWC -> NCHW.
    out = out_flat[:, :R0, :Cout].reshape(N, Hp, Wp, Cout)[:, :Hout, :Wout, :]
    return jnp.transpose(out, (0, 3, 1, 2))


if __name__ == "__main__":
    key = jax.random.PRNGKey(0)
    k_x, k_w, k_b = jax.random.split(key, 3)

    # NormConv2d(4, 8, kernel_size=3, padding=1, norm='weight_norm')
    N, Cin, H, W = 2, 4, 16, 16
    Cout, KH, KW = 8, 3, 3
    padding = 1

    x = jax.random.normal(k_x, (N, Cin, H, W), dtype=jnp.float32)
    weight_v = jax.random.normal(k_w, (Cout, Cin, KH, KW), dtype=jnp.float32) * 0.1
    bias = jax.random.normal(k_b, (Cout,), dtype=jnp.float32) * 0.1
    # weight_norm init sets g = ||v||; use non-trivial g to exercise the reparam.
    weight_g = jnp.linspace(0.5, 1.5, Cout, dtype=jnp.float32)

    out = norm_conv2d(x, weight_v, bias, padding=padding,
                      norm="weight_norm", weight_g=weight_g)
    out = jax.block_until_ready(out)
    assert out.shape == (N, Cout, H, W)

    # Effective weight (weight_norm reparametrization), computed independently.
    v_norm = jnp.sqrt(jnp.sum(weight_v ** 2, axis=(1, 2, 3), keepdims=True))
    w_eff = weight_g.reshape(-1, 1, 1, 1) * weight_v / v_norm

    # Reference 1: same bf16-cast inputs, f32 accumulation -> tight tolerance.
    ref_bf16 = jax.lax.conv_general_dilated(
        x.astype(jnp.bfloat16), w_eff.astype(jnp.bfloat16),
        window_strides=(1, 1),
        padding=((padding, padding), (padding, padding)),
        dimension_numbers=("NCHW", "OIHW", "NCHW"),
        preferred_element_type=jnp.float32,
    ) + bias.reshape(1, Cout, 1, 1)
    assert jnp.allclose(out, ref_bf16, atol=1e-2, rtol=1e-2)

    # Reference 2: full-f32 conv, loose tolerance (bf16 input quantization).
    ref_f32 = jax.lax.conv_general_dilated(
        x, w_eff, window_strides=(1, 1),
        padding=((padding, padding), (padding, padding)),
        dimension_numbers=("NCHW", "OIHW", "NCHW"),
    ) + bias.reshape(1, Cout, 1, 1)
    assert jnp.allclose(out, ref_f32, atol=1e-1, rtol=1e-1)

    print("KERNEL_OK")
</pallas_src>

<mosaic_0001>
module attributes {stable_mosaic.version = 11 : i64} {
  func.func @_conv2d_rows_kernel(%arg0: i32, %arg1: i32, %arg2: memref<1x424x4xbf16, #tpu.memory_space<vmem>>, %arg3: memref<9x4x128xbf16, #tpu.memory_space<vmem>>, %arg4: memref<1x128xf32, #tpu.memory_space<vmem>>, %arg5: memref<1x128x128xf32, #tpu.memory_space<vmem>>) attributes {dimension_semantics = [#tpu.dimension_semantics<parallel>, #tpu.dimension_semantics<parallel>], iteration_bounds = array<i64: 2, 3>, scalar_prefetch = 0 : i64, scratch_operands = 0 : i64, tpu.core_type = #tpu.core_type<tc>, window_params = [{transform_indices = @transform_0, window_bounds = array<i64: 1, 424, 4>}, {pipeline_mode = #tpu.pipeline_mode<synchronous>, transform_indices = @transform_1, window_bounds = array<i64: 9, 4, 128>}, {pipeline_mode = #tpu.pipeline_mode<synchronous>, transform_indices = @transform_2, window_bounds = array<i64: 1, 128>}, {transform_indices = @transform_3, window_bounds = array<i64: 1, 128, 128>}]} {
    %c128_i32 = arith.constant 128 : i32
    %0 = arith.muli %arg1, %c128_i32 : i32
    %1 = tpu.assume_multiple %0, 8 : i32
    %c0 = arith.constant 0 : index
    %2 = arith.index_cast %1 : i32 to index
    %c0_0 = arith.constant 0 : index
    %3 = vector.load %arg2[%c0, %2, %c0_0] : memref<1x424x4xbf16, #tpu.memory_space<vmem>>, vector<1x168x4xbf16>
    %4 = vector.shape_cast %3 : vector<1x168x4xbf16> to vector<168x4xbf16>
    %5 = vector.extract_strided_slice %4 {offsets = [0, 0], sizes = [128, 4], strides = [1, 1]} : vector<168x4xbf16> to vector<128x4xbf16>
    %c0_1 = arith.constant 0 : index
    %c0_2 = arith.constant 0 : index
    %c0_3 = arith.constant 0 : index
    %6 = vector.load %arg3[%c0_1, %c0_2, %c0_3] : memref<9x4x128xbf16, #tpu.memory_space<vmem>>, vector<1x4x128xbf16>
    %7 = vector.shape_cast %6 : vector<1x4x128xbf16> to vector<4x128xbf16>
    %cst = arith.constant dense<0.000000e+00> : vector<128x128xf32>
    %8 = tpu.matmul %5, %7, %cst {dimension_numbers = #tpu.dot_dimension_numbers<[1], [0], [0], [1], [0, 0, 1, 1], [], []>} : vector<128x4xbf16>, vector<4x128xbf16>, vector<128x128xf32> -> vector<128x128xf32>
    %9 = vector.extract_strided_slice %4 {offsets = [1, 0], sizes = [128, 4], strides = [1, 1]} : vector<168x4xbf16> to vector<128x4xbf16>
    %c1 = arith.constant 1 : index
    %c0_4 = arith.constant 0 : index
    %c0_5 = arith.constant 0 : index
    %10 = vector.load %arg3[%c1, %c0_4, %c0_5] : memref<9x4x128xbf16, #tpu.memory_space<vmem>>, vector<1x4x128xbf16>
    %11 = vector.shape_cast %10 : vector<1x4x128xbf16> to vector<4x128xbf16>
    %cst_6 = arith.constant dense<0.000000e+00> : vector<128x128xf32>
    %12 = tpu.matmul %9, %11, %cst_6 {dimension_numbers = #tpu.dot_dimension_numbers<[1], [0], [0], [1], [0, 0, 1, 1], [], []>} : vector<128x4xbf16>, vector<4x128xbf16>, vector<128x128xf32> -> vector<128x128xf32>
    %13 = arith.addf %8, %12 : vector<128x128xf32>
    %14 = vector.extract_strided_slice %4 {offsets = [2, 0], sizes = [128, 4], strides = [1, 1]} : vector<168x4xbf16> to vector<128x4xbf16>
    %c2 = arith.constant 2 : index
    %c0_7 = arith.constant 0 : index
    %c0_8 = arith.constant 0 : index
    %15 = vector.load %arg3[%c2, %c0_7, %c0_8] : memref<9x4x128xbf16, #tpu.memory_space<vmem>>, vector<1x4x128xbf16>
    %16 = vector.shape_cast %15 : vector<1x4x128xbf16> to vector<4x128xbf16>
    %cst_9 = arith.constant dense<0.000000e+00> : vector<128x128xf32>
    %17 = tpu.matmul %14, %16, %cst_9 {dimension_numbers = #tpu.dot_dimension_numbers<[1], [0], [0], [1], [0, 0, 1, 1], [], []>} : vector<128x4xbf16>, vector<4x128xbf16>, vector<128x128xf32> -> vector<128x128xf32>
    %18 = arith.addf %13, %17 : vector<128x128xf32>
    %19 = vector.extract_strided_slice %4 {offsets = [18, 0], sizes = [128, 4], strides = [1, 1]} : vector<168x4xbf16> to vector<128x4xbf16>
    %c3 = arith.constant 3 : index
    %c0_10 = arith.constant 0 : index
    %c0_11 = arith.constant 0 : index
    %20 = vector.load %arg3[%c3, %c0_10, %c0_11] : memref<9x4x128xbf16, #tpu.memory_space<vmem>>, vector<1x4x128xbf16>
    %21 = vector.shape_cast %20 : vector<1x4x128xbf16> to vector<4x128xbf16>
    %cst_12 = arith.constant dense<0.000000e+00> : vector<128x128xf32>
    %22 = tpu.matmul %19, %21, %cst_12 {dimension_numbers = #tpu.dot_dimension_numbers<[1], [0], [0], [1], [0, 0, 1, 1], [], []>} : vector<128x4xbf16>, vector<4x128xbf16>, vector<128x128xf32> -> vector<128x128xf32>
    %23 = arith.addf %18, %22 : vector<128x128xf32>
    %24 = vector.extract_strided_slice %4 {offsets = [19, 0], sizes = [128, 4], strides = [1, 1]} : vector<168x4xbf16> to vector<128x4xbf16>
    %c4 = arith.constant 4 : index
    %c0_13 = arith.constant 0 : index
    %c0_14 = arith.constant 0 : index
    %25 = vector.load %arg3[%c4, %c0_13, %c0_14] : memref<9x4x128xbf16, #tpu.memory_space<vmem>>, vector<1x4x128xbf16>
    %26 = vector.shape_cast %25 : vector<1x4x128xbf16> to vector<4x128xbf16>
    %cst_15 = arith.constant dense<0.000000e+00> : vector<128x128xf32>
    %27 = tpu.matmul %24, %26, %cst_15 {dimension_numbers = #tpu.dot_dimension_numbers<[1], [0], [0], [1], [0, 0, 1, 1], [], []>} : vector<128x4xbf16>, vector<4x128xbf16>, vector<128x128xf32> -> vector<128x128xf32>
    %28 = arith.addf %23, %27 : vector<128x128xf32>
    %29 = vector.extract_strided_slice %4 {offsets = [20, 0], sizes = [128, 4], strides = [1, 1]} : vector<168x4xbf16> to vector<128x4xbf16>
    %c5 = arith.constant 5 : index
    %c0_16 = arith.constant 0 : index
    %c0_17 = arith.constant 0 : index
    %30 = vector.load %arg3[%c5, %c0_16, %c0_17] : memref<9x4x128xbf16, #tpu.memory_space<vmem>>, vector<1x4x128xbf16>
    %31 = vector.shape_cast %30 : vector<1x4x128xbf16> to vector<4x128xbf16>
    %cst_18 = arith.constant dense<0.000000e+00> : vector<128x128xf32>
    %32 = tpu.matmul %29, %31, %cst_18 {dimension_numbers = #tpu.dot_dimension_numbers<[1], [0], [0], [1], [0, 0, 1, 1], [], []>} : vector<128x4xbf16>, vector<4x128xbf16>, vector<128x128xf32> -> vector<128x128xf32>
    %33 = arith.addf %28, %32 : vector<128x128xf32>
    %34 = vector.extract_strided_slice %4 {offsets = [36, 0], sizes = [128, 4], strides = [1, 1]} : vector<168x4xbf16> to vector<128x4xbf16>
    %c6 = arith.constant 6 : index
    %c0_19 = arith.constant 0 : index
    %c0_20 = arith.constant 0 : index
    %35 = vector.load %arg3[%c6, %c0_19, %c0_20] : memref<9x4x128xbf16, #tpu.memory_space<vmem>>, vector<1x4x128xbf16>
    %36 = vector.shape_cast %35 : vector<1x4x128xbf16> to vector<4x128xbf16>
    %cst_21 = arith.constant dense<0.000000e+00> : vector<128x128xf32>
    %37 = tpu.matmul %34, %36, %cst_21 {dimension_numbers = #tpu.dot_dimension_numbers<[1], [0], [0], [1], [0, 0, 1, 1], [], []>} : vector<128x4xbf16>, vector<4x128xbf16>, vector<128x128xf32> -> vector<128x128xf32>
    %38 = arith.addf %33, %37 : vector<128x128xf32>
    %39 = vector.extract_strided_slice %4 {offsets = [37, 0], sizes = [128, 4], strides = [1, 1]} : vector<168x4xbf16> to vector<128x4xbf16>
    %c7 = arith.constant 7 : index
    %c0_22 = arith.constant 0 : index
    %c0_23 = arith.constant 0 : index
    %40 = vector.load %arg3[%c7, %c0_22, %c0_23] : memref<9x4x128xbf16, #tpu.memory_space<vmem>>, vector<1x4x128xbf16>
    %41 = vector.shape_cast %40 : vector<1x4x128xbf16> to vector<4x128xbf16>
    %cst_24 = arith.constant dense<0.000000e+00> : vector<128x128xf32>
    %42 = tpu.matmul %39, %41, %cst_24 {dimension_numbers = #tpu.dot_dimension_numbers<[1], [0], [0], [1], [0, 0, 1, 1], [], []>} : vector<128x4xbf16>, vector<4x128xbf16>, vector<128x128xf32> -> vector<128x128xf32>
    %43 = arith.addf %38, %42 : vector<128x128xf32>
    %44 = vector.extract_strided_slice %4 {offsets = [38, 0], sizes = [128, 4], strides = [1, 1]} : vector<168x4xbf16> to vector<128x4xbf16>
    %c8 = arith.constant 8 : index
    %c0_25 = arith.constant 0 : index
    %c0_26 = arith.constant 0 : index
    %45 = vector.load %arg3[%c8, %c0_25, %c0_26] : memref<9x4x128xbf16, #tpu.memory_space<vmem>>, vector<1x4x128xbf16>
    %46 = vector.shape_cast %45 : vector<1x4x128xbf16> to vector<4x128xbf16>
    %cst_27 = arith.constant dense<0.000000e+00> : vector<128x128xf32>
    %47 = tpu.matmul %44, %46, %cst_27 {dimension_numbers = #tpu.dot_dimension_numbers<[1], [0], [0], [1], [0, 0, 1, 1], [], []>} : vector<128x4xbf16>, vector<4x128xbf16>, vector<128x128xf32> -> vector<128x128xf32>
    %48 = arith.addf %43, %47 : vector<128x128xf32>
    %c0_28 = arith.constant 0 : index
    %c0_29 = arith.constant 0 : index
    %49 = vector.load %arg4[%c0_28, %c0_29] : memref<1x128xf32, #tpu.memory_space<vmem>>, vector<1x128xf32>
    %50 = vector.broadcast %49 : vector<1x128xf32> to vector<128x128xf32>
    %51 = arith.addf %48, %50 : vector<128x128xf32>
    %c0_30 = arith.constant 0 : index
    %c0_31 = arith.constant 0 : index
    %c0_32 = arith.constant 0 : index
    %52 = vector.load %arg5[%c0_30, %c0_31, %c0_32] : memref<1x128x128xf32, #tpu.memory_space<vmem>>, vector<1x128x128xf32>
    %53 = vector.shape_cast %52 : vector<1x128x128xf32> to vector<128x128xf32>
    %54 = vector.shape_cast %51 : vector<128x128xf32> to vector<1x128x128xf32>
    tpu.vector_store %arg5[%c0_30, %c0_31, %c0_32], %54 {strides = array<i32>} : memref<1x128x128xf32, #tpu.memory_space<vmem>>, vector<1x128x128xf32>,
    return
  }
  func.func @transform_0(%arg0: i32, %arg1: i32) -> (i32, i32, i32) {
    %c0_i32 = arith.constant 0 : i32
    %c0_i32_0 = arith.constant 0 : i32
    %c0_i32_1 = arith.constant 0 : i32
    return %arg0, %c0_i32, %c0_i32_0 : i32, i32, i32
  }
  func.func @transform_1(%arg0: i32, %arg1: i32) -> (i32, i32, i32) {
    %c0_i32 = arith.constant 0 : i32
    %c0_i32_0 = arith.constant 0 : i32
    %c0_i32_1 = arith.constant 0 : i32
    %c0_i32_2 = arith.constant 0 : i32
    return %c0_i32, %c0_i32_0, %c0_i32_1 : i32, i32, i32
  }
  func.func @transform_2(%arg0: i32, %arg1: i32) -> (i32, i32) {
    %c0_i32 = arith.constant 0 : i32
    %c0_i32_0 = arith.constant 0 : i32
    %c0_i32_1 = arith.constant 0 : i32
    return %c0_i32, %c0_i32_0 : i32, i32
  }
  func.func @transform_3(%arg0: i32, %arg1: i32) -> (i32, i32, i32) {
    %c0_i32 = arith.constant 0 : i32
    %c0_i32_0 = arith.constant 0 : i32
    return %arg0, %arg1, %c0_i32 : i32, i32, i32
  }
}

</mosaic_0001>

<llo_original>
// kernel: tpu_custom_call.1
$region0: #{tpu_custom_call.1}
  #allocation0 [shape = 'u32[]', space=smem, size = 0x4, offset = 0x4, fixed_abs, tag = 'smem constant byte address 0x4 - core index']
  #allocation1 [shape = 'u32[144,128]{1,0:T(1,128)}', space=vmem, size = 0x12000, scoped, tag = 'internal scratch']
  %s0 = inlined_call_operand.vmem [shape: bf16[2,424,4], index: 0, kind: input, shape index: {}]
  %s1 = inlined_call_operand.vmem [shape: bf16[9,4,128], index: 1, kind: input, shape index: {}]
  %s2 = inlined_call_operand.vmem [shape: f32[1,128], index: 2, kind: input, shape index: {}]
  %s3 = inlined_call_operand.hbm [shape: f32[2,384,128], index: 3, kind: output, shape index: {}]
  %s4 = sld [smem:[#allocation0]]
  $region45: #{tpu_custom_call.1} parent=0
    _
  %s6 = ssub.s32 1, %s4
  %s7 = scalar_select 0, %s6, %s4
  $region1: #{tpu_custom_call.1} parent=0
    #allocation2 [shape = 'u8[131072]{0}', space=vmem, size = 0x20000, scoped, tag = 'output window, operand 0']
    #allocation3 [shape = 's32[2]{0}', space=sflag, size = 0x8, scoped, tag = 'scoped memory for tpu_custom_call.1']
    %8 = vsyncpa [#allocation3], 0
    %s9 = scalar_lea.sflag [#allocation3], 1
    %10 = vsyncpa %s9, 0
    loop: start=0, step=1, limit=8
    $region2: #{tpu_custom_call.1} parent=1 // loop_pre_header
      _
    $region3: #{tpu_custom_call.1} parent=1 // loop_header
      %s12 = sphi 0, %s16
      %p13 = scmp.ge.s32.totalorder %s12, 8
      %s19 = sphi 0, %s31
      %s20 = sphi 0, %s27
      %s21 = sphi 0, %s19
      %s22 = sphi 0, %s20
      %s23 = sphi 0, %s21
      %s24 = sphi 0, %s22
      %s34 = sphi 0, %s36
      %s37 = sphi 0, %s34
      %s38 = sphi 0, %s37
      %s54 = sphi 0, %s38
      %s58 = sphi 0, %s58
      %s60 = sphi 0, %s58
      %s61 = sphi 0, %s60
      %s75 = sphi 0, %s61
      %s79 = sphi 0, %s79
      %s81 = sphi 0, %s79
      %s82 = sphi 0, %s81
      %s96 = sphi 0, %s82
      %s104 = sphi 0, %s106
      %s107 = sphi 0, %s104
      %s108 = sphi 0, %s107
      %s124 = sphi 0, %s108
    $region4: #{tpu_custom_call.1} parent=1 // loop_header_branch
      %15 = sbr.rel (%p13) target = $region8
    $region5: #{tpu_custom_call.1} parent=1 // loop_body
      %s17 = ssub.s32 %s12, 1
      %s18 = ssub.s32 %s12, 2
      %s25 = sadd.s32 1, %s20
      %p26 = scmp.ge.s32.totalorder %s25, 3
      %s27 = scalar_select %p26, 0, %s25
      %s28 = sadd.s32 1, %s19
      %s29 = scalar_select %p26, %s28, %s19
      %p30 = scmp.ge.s32.totalorder %s29, 2
      %s31 = scalar_select %p30, 0, %s29
      %s32 = ssub.s32 %s19, %s31
      %p33 = scmp.eq.s32.totalorder %s32, 0
      %s35 = sadd.s32 %s34, 1
      %s36 = scalar_select %p33, %s34, %s35
      %p39 = pneg %p33
      %p40 = scmp.eq.s32.totalorder %s12, 5
      %p41 = por %p39, %p40
      %p42 = scmp.ne.s32.totalorder %s34, %s37
      %p43 = scmp.eq.s32.totalorder %s12, 0
      %p44 = por %p42, %p43
      %p45 = scmp.ne.s32.totalorder %s34, %s37
      %p46 = scmp.eq.s32.totalorder %s17, 5
      %p47 = por %p45, %p46
      %p48 = scmp.ne.s32.totalorder %s37, %s38
      %p49 = scmp.eq.s32.totalorder %s17, 0
      %p50 = por %p48, %p49
      %p51 = scmp.ne.s32.totalorder %s37, %s38
      %p52 = scmp.eq.s32.totalorder %s18, 5
      %p53 = por %p51, %p52
      %p55 = scmp.ne.s32.totalorder %s38, %s54
      %p56 = scmp.eq.s32.totalorder %s18, 0
      %p57 = por %p55, %p56
      %s59 = sadd.s32 %s58, 1
      %p62 = scmp.eq.s32.totalorder %s12, 5
      %p63 = scmp.ne.s32.totalorder %s58, %s60
      %p64 = scmp.eq.s32.totalorder %s12, 0
      %p65 = por %p63, %p64
      %p66 = scmp.ne.s32.totalorder %s58, %s60
      %p67 = scmp.eq.s32.totalorder %s17, 5
      %p68 = por %p66, %p67
      %p69 = scmp.ne.s32.totalorder %s60, %s61
      %p70 = scmp.eq.s32.totalorder %s17, 0
      %p71 = por %p69, %p70
      %p72 = scmp.ne.s32.totalorder %s60, %s61
      %p73 = scmp.eq.s32.totalorder %s18, 5
      %p74 = por %p72, %p73
      %p76 = scmp.ne.s32.totalorder %s61, %s75
      %p77 = scmp.eq.s32.totalorder %s18, 0
      %p78 = por %p76, %p77
      %s80 = sadd.s32 %s79, 1
      %p83 = scmp.eq.s32.totalorder %s12, 5
      %p84 = scmp.ne.s32.totalorder %s79, %s81
      %p85 = scmp.eq.s32.totalorder %s12, 0
      %p86 = por %p84, %p85
      %p87 = scmp.ne.s32.totalorder %s79, %s81
      %p88 = scmp.eq.s32.totalorder %s17, 5
      %p89 = por %p87, %p88
      %p90 = scmp.ne.s32.totalorder %s81, %s82
      %p91 = scmp.eq.s32.totalorder %s17, 0
      %p92 = por %p90, %p91
      %p93 = scmp.ne.s32.totalorder %s81, %s82
      %p94 = scmp.eq.s32.totalorder %s18, 5
      %p95 = por %p93, %p94
      %p97 = scmp.ne.s32.totalorder %s82, %s96
      %p98 = scmp.eq.s32.totalorder %s18, 0
      %p99 = por %p97, %p98
      %s100 = ssub.s32 %s19, %s31
      %s101 = ssub.s32 %s20, %s27
      %s102 = sor.u32 %s100, %s101
      %p103 = scmp.eq.s32.totalorder %s102, 0
      %s105 = sadd.s32 %s104, 1
      %s106 = scalar_select %p103, %s104, %s105
      %p109 = pneg %p103
      %p110 = scmp.eq.s32.totalorder %s12, 5
      %p111 = por %p109, %p110
      %p112 = scmp.ne.s32.totalorder %s104, %s107
      %p113 = scmp.eq.s32.totalorder %s12, 0
      %p114 = por %p112, %p113
      %p115 = scmp.ne.s32.totalorder %s104, %s107
      %p116 = scmp.eq.s32.totalorder %s17, 5
      %p117 = por %p115, %p116
      %p118 = scmp.ne.s32.totalorder %s107, %s108
      %p119 = scmp.eq.s32.totalorder %s17, 0
      %p120 = por %p118, %p119
      %p121 = scmp.ne.s32.totalorder %s107, %s108
      %p122 = scmp.eq.s32.totalorder %s18, 5
      %p123 = por %p121, %p122
      %p125 = scmp.ne.s32.totalorder %s108, %s124
      %p126 = scmp.eq.s32.totalorder %s18, 0
      %p127 = por %p125, %p126
      %p128 = scmp.le.s32.totalorder 1, %s12
      %p129 = scmp.lt.s32.totalorder %s12, 7
      %p130 = pnand %p128, %p129
      %p131 = pneg %p130
      // Predicated region
      $region9: #{tpu_custom_call.1} parent=5 // pred_check
        _
      $region10: #{tpu_custom_call.1} parent=5 // pred_check_branch
        %133 = sbr.rel (%p130) target = $region12
      $region11: #{tpu_custom_call.1} parent=5 // pred_region
        %s134 = ssub.s32 %s12, 1
        // Predicated region
        $region13: #{tpu_custom_call.1} parent=11 // pred_check
          %p135 = pneg %p71
        $region14: #{tpu_custom_call.1} parent=11 // pred_check_branch
          %137 = sbr.rel (%p135) target = $region16
        $region15: #{tpu_custom_call.1} parent=11 // pred_region
          _
        $region16: #{tpu_custom_call.1} parent=11 // pred_fallthru
          _
        // Predicated region
        $region17: #{tpu_custom_call.1} parent=11 // pred_check
          %p138 = pneg %p92
        $region18: #{tpu_custom_call.1} parent=11 // pred_check_branch
          %140 = sbr.rel (%p138) target = $region20
        $region19: #{tpu_custom_call.1} parent=11 // pred_region
          _
        $region20: #{tpu_custom_call.1} parent=11 // pred_fallthru
          _
      $region12: #{tpu_custom_call.1} parent=5 // pred_fallthru
        _
      %p141 = scmp.lt.s32.totalorder %s12, 6
      // Predicated region
      $region21: #{tpu_custom_call.1} parent=5 // pred_check
        %p142 = pneg %p141
      $region22: #{tpu_custom_call.1} parent=5 // pred_check_branch
        %144 = sbr.rel (%p142) target = $region24
      $region23: #{tpu_custom_call.1} parent=5 // pred_region
        // Predicated region
        $region25: #{tpu_custom_call.1} parent=23 // pred_check
          %p145 = pneg %p44
        $region26: #{tpu_custom_call.1} parent=23 // pred_check_branch
          %147 = sbr.rel (%p145) target = $region28
        $region27: #{tpu_custom_call.1} parent=23 // pred_region
          %p148 = scmp.lt.s32.totalorder %s19, 1
          %s149 = scalar_select %p148, %s19, 1
          %s150 = smul.addr %s149, 53
          %s151 = smul.addr %s150, 4
          %s152 = scalar_lea.vmem %s0, %s151
        $region28: #{tpu_custom_call.1} parent=23 // pred_fallthru
          _
      $region24: #{tpu_custom_call.1} parent=5 // pred_fallthru
        _
      %p153 = scmp.le.s32.totalorder 1, %s12
      %p154 = scmp.lt.s32.totalorder %s12, 7
      %p155 = pnand %p153, %p154
      %p156 = pneg %p155
      // Predicated region
      $region29: #{tpu_custom_call.1} parent=5 // pred_check
        _
      $region30: #{tpu_custom_call.1} parent=5 // pred_check_branch
        %158 = sbr.rel (%p155) target = $region32
      $region31: #{tpu_custom_call.1} parent=5 // pred_region
        %s159 = ssub.s32 %s12, 1
        %p160 = scmp.lt.s32.totalorder %s21, 1
        %s161 = scalar_select %p160, %s21, 1
        %s162 = smul.addr %s161, 53
        %s163 = smul.addr %s162, 4
        %s164 = scalar_lea.vmem %s0, %s163
        %p165 = pneg %p50
        %p166 = pneg %p47
        %p167 = pneg %p71
        %p168 = pneg %p68
        %p169 = pneg %p92
        %p170 = pneg %p89
        %p171 = pneg %p120
        %p172 = pneg %p117
        %s173 = sand.u32 %s107, 1
        %s174 = scalar_lea.sflag [#allocation3], %s173
        %s175 = sand.u32 %s107, 1
        %s176 = smul.addr %s175, 128
        %s177 = scalar_lea.vmem [#allocation2], %s176
        %p178 = scmp.lt.s32.totalorder %s21, 1
        %s179 = scalar_select %p178, %s21, 1
        %s180 = smul.addr %s179, 53
        %s181 = smul.addr %s180, 4
        %s182 = scalar_lea.vmem %s0, %s181
        %s183 = smul.u32 16, %s22
        %s185 = smul.u32 %s22, 128
        %s186 = sshra.s32 %s185, 3
        %s187 = sand.u32 %s185, 7
        %s188 = smul.addr %s186, 4
        %s189 = scalar_lea.vmem %s182, %s188
        %v190 = vld [vmem:[%s189] sm:$0xf]
        %v191 = vld [vmem:[%s189 + $0x4] sm:$0xf]
        %v192 = vld [vmem:[%s189 + $0x8] sm:$0xf]
        %v193 = vld [vmem:[%s189 + $0xc] sm:$0xf]
        %v194 = vld [vmem:[%s189 + $0x10] sm:$0xf]
        %v195 = vld [vmem:[%s189 + $0x14] sm:$0xf]
        %v196 = vld [vmem:[%s189 + $0x18] sm:$0xf]
        %v197 = vld [vmem:[%s189 + $0x1c] sm:$0xf]
        %v198 = vld [vmem:[%s189 + $0x20] sm:$0xf]
        %v199 = vld [vmem:[%s189 + $0x24] sm:$0xf]
        %v200 = vld [vmem:[%s189 + $0x28] sm:$0xf]
        %v201 = vld [vmem:[%s189 + $0x2c] sm:$0xf]
        %v202 = vld [vmem:[%s189 + $0x30] sm:$0xf]
        %v203 = vld [vmem:[%s189 + $0x34] sm:$0xf]
        %v204 = vld [vmem:[%s189 + $0x38] sm:$0xf]
        %v205 = vld [vmem:[%s189 + $0x3c] sm:$0xf]
        %v206 = vld [vmem:[%s189 + $0x40] sm:$0xf]
        %v207 = vld [vmem:[%s189 + $0x44] sm:$0xf]
        %v208 = vld [vmem:[%s189 + $0x48] sm:$0xf]
        %v209 = vld [vmem:[%s189 + $0x4c] sm:$0xf]
        %v210 = vld [vmem:[%s189 + $0x50] sm:$0xf]
        %v211 = vld [vmem:[%s1] sm:$0x3]
        %s212 = scalar_lea.vmem %s1, 2
        %v213 = vld [vmem:[%s212] sm:$0x3]
        %v231 = vunpack.c.l.b16 %v190
        %v232 = vunpack.c.l.b16 %v191
        %v233 = vunpack.c.l.b16 %v192
        %v234 = vunpack.c.l.b16 %v193
        %v235 = vunpack.c.l.b16 %v194
        %v236 = vunpack.c.l.b16 %v195
        %v237 = vunpack.c.l.b16 %v196
        %v238 = vunpack.c.l.b16 %v197
        %v239 = vunpack.c.l.b16 %v198
        %v240 = vunpack.c.l.b16 %v199
        %v241 = vunpack.c.l.b16 %v200
        %v242 = vunpack.c.l.b16 %v201
        %v243 = vunpack.c.l.b16 %v202
        %v244 = vunpack.c.l.b16 %v203
        %v245 = vunpack.c.l.b16 %v204
        %v246 = vunpack.c.l.b16 %v205
        %v247 = vunpack.c.l.b16 %v206
        %v248 = vpack.c.b16 %v232, %v231
        %v249 = vpack.c.b16 %v234, %v233
        %v250 = vpack.c.b16 %v236, %v235
        %v251 = vpack.c.b16 %v238, %v237
        %v252 = vpack.c.b16 %v240, %v239
        %v253 = vpack.c.b16 %v242, %v241
        %v254 = vpack.c.b16 %v244, %v243
        %v255 = vpack.c.b16 %v246, %v245
        %v256 = vpack.c.b16 %v247, %v247
        %vm257 = vsmask.f32 7424
        %v259 = vshrl.u32 %v248, 16
        %v261 = vshll.u32 %v248, 16
        %v263 = vrot.slane %v261, 1
        %v264 = vor.u32 %v259, %v263
        %v266 = vshll.u32 %v249, 16
        %v268 = vrot.slane %v266, 1
        %v269 = vsel %vm257, %v264, %v268
        %v270 = vshrl.u32 %v249, 16
        %v272 = vor.u32 %v270, %v268
        %v274 = vshll.u32 %v250, 16
        %v276 = vrot.slane %v274, 1
        %v277 = vsel %vm257, %v272, %v276
        %v278 = vshrl.u32 %v250, 16
        %v280 = vor.u32 %v278, %v276
        %v282 = vshll.u32 %v251, 16
        %v284 = vrot.slane %v282, 1
        %v285 = vsel %vm257, %v280, %v284
        %v286 = vshrl.u32 %v251, 16
        %v288 = vor.u32 %v286, %v284
        %v290 = vshll.u32 %v252, 16
        %v292 = vrot.slane %v290, 1
        %v293 = vsel %vm257, %v288, %v292
        %v294 = vshrl.u32 %v252, 16
        %v296 = vor.u32 %v294, %v292
        %v298 = vshll.u32 %v253, 16
        %v300 = vrot.slane %v298, 1
        %v301 = vsel %vm257, %v296, %v300
        %v302 = vshrl.u32 %v253, 16
        %v304 = vor.u32 %v302, %v300
        %v306 = vshll.u32 %v254, 16
        %v308 = vrot.slane %v306, 1
        %v309 = vsel %vm257, %v304, %v308
        %v310 = vshrl.u32 %v254, 16
        %v312 = vor.u32 %v310, %v308
        %v314 = vshll.u32 %v255, 16
        %v316 = vrot.slane %v314, 1
        %v317 = vsel %vm257, %v312, %v316
        %v318 = vshrl.u32 %v255, 16
        %v320 = vor.u32 %v318, %v316
        %v322 = vshll.u32 %v256, 16
        %v324 = vrot.slane %v322, 1
        %v325 = vsel %vm257, %v320, %v324
        %vm326 = vcmask 31744
        %v328 = vsel %vm326, %v269, 0
        %v331 = vsel %vm326, %v277, 0
        %v334 = vsel %vm326, %v285, 0
        %v337 = vsel %vm326, %v293, 0
        %v340 = vsel %vm326, %v301, 0
        %v343 = vsel %vm326, %v309, 0
        %v346 = vsel %vm326, %v317, 0
        %v349 = vsel %vm326, %v325, 0
        %vm351 = vcmask 1041408
        %v353 = vsel %vm351, %v213, 0
        %355 = vmatprep.subr.bf16.mxu0 0
        %356 = vmatpush1.bf16.msra.mxu0 %v353
        %357 = vmatprep.subr.bf16.mxu0 0
        %358 = vmatpush1.bf16.msra.mxu0 0
        %359 = vmatprep.subr.bf16.mxu0 0
        %360 = vmatpush1.bf16.msra.mxu0 0
        %361 = vmatprep.subr.bf16.mxu0 0
        %362 = vmatpush1.bf16.msra.mxu0 0
        %363 = vmatprep.subr.bf16.mxu0 0
        %364 = vmatpush1.bf16.msra.mxu0 0
        %365 = vmatprep.subr.bf16.mxu0 0
        %366 = vmatpush1.bf16.msra.mxu0 0
        %367 = vmatprep.subr.bf16.mxu0 0
        %368 = vmatpush1.bf16.msra.mxu0 0
        %369 = vmatprep.subr.bf16.mxu0 0
        %370 = vmatpush1.bf16.msra.mxu0 0
        %371 = vmatprep.subr.bf16.mxu0 0
        %372 = vmatpush1.bf16.msra.mxu0 0
        %373 = vmatprep.subr.bf16.mxu0 0
        %374 = vmatpush1.bf16.msra.mxu0 0
        %375 = vmatprep.subr.bf16.mxu0 0
        %376 = vmatpush1.bf16.msra.mxu0 0
        %377 = vmatprep.subr.bf16.mxu0 0
        %378 = vmatpush1.bf16.msra.mxu0 0
        %379 = vmatprep.subr.bf16.mxu0 0
        %380 = vmatpush1.bf16.msra.mxu0 0
        %381 = vmatprep.subr.bf16.mxu0 0
        %382 = vmatpush1.bf16.msra.mxu0 0
        %383 = vmatprep.subr.bf16.mxu0 0
        %384 = vmatpush1.bf16.msra.mxu0 0
        %385 = vmatprep.subr.bf16.mxu0 0
        %386 = vmatpush1.bf16.msra.mxu0 0
        %387 = vmatprep.mubr.bf16.mxu0 0
        %388 = vmatmul.mubr.bf16.gmra.mrb[0].mxu0 %v328
        %v389 = vpop.f32.mrb[0].mxu0
        %v390 = vadd.f32 0.0, %v389
        %v391 = vpop.f32.mrb[0].mxu0
        %v392 = vpop.f32.mrb[0].mxu0
        %v393 = vadd.f32 0.0, %v392
        %v394 = vpop.f32.mrb[0].mxu0
        %395 = vmatprep.mubr.bf16.mxu0 0
        %396 = vmatmul.mubr.bf16.gmra.mrb[0].mxu0 %v331
        %v397 = vpop.f32.mrb[0].mxu0
        %v398 = vadd.f32 0.0, %v397
        %v399 = vpop.f32.mrb[0].mxu0
        %v400 = vpop.f32.mrb[0].mxu0
        %v401 = vadd.f32 0.0, %v400
        %v402 = vpop.f32.mrb[0].mxu0
        %403 = vmatprep.mubr.bf16.mxu0 0
        %404 = vmatmul.mubr.bf16.gmra.mrb[0].mxu0 %v334
        %v405 = vpop.f32.mrb[0].mxu0
        %v406 = vadd.f32 0.0, %v405
        %v407 = vpop.f32.mrb[0].mxu0
        %v408 = vpop.f32.mrb[0].mxu0
        %v409 = vadd.f32 0.0, %v408
        %v410 = vpop.f32.mrb[0].mxu0
        %411 = vmatprep.mubr.bf16.mxu0 0
        %412 = vmatmul.mubr.bf16.gmra.mrb[0].mxu0 %v337
        %v413 = vpop.f32.mrb[0].mxu0
        %v414 = vadd.f32 0.0, %v413
        %v415 = vpop.f32.mrb[0].mxu0
        %v416 = vpop.f32.mrb[0].mxu0
        %v417 = vadd.f32 0.0, %v416
        %v418 = vpop.f32.mrb[0].mxu0
        %419 = vmatprep.mubr.bf16.mxu0 0
        %420 = vmatmul.mubr.bf16.gmra.mrb[0].mxu0 %v340
        %v421 = vpop.f32.mrb[0].mxu0
        %v422 = vadd.f32 0.0, %v421
        %v423 = vpop.f32.mrb[0].mxu0
        %v424 = vpop.f32.mrb[0].mxu0
        %v425 = vadd.f32 0.0, %v424
        %v426 = vpop.f32.mrb[0].mxu0
        %427 = vmatprep.mubr.bf16.mxu0 0
        %428 = vmatmul.mubr.bf16.gmra.mrb[0].mxu0 %v343
        %v429 = vpop.f32.mrb[0].mxu0
        %v430 = vadd.f32 0.0, %v429
        %v431 = vpop.f32.mrb[0].mxu0
        %v432 = vpop.f32.mrb[0].mxu0
        %v433 = vadd.f32 0.0, %v432
        %v434 = vpop.f32.mrb[0].mxu0
        %435 = vmatprep.mubr.bf16.mxu0 0
        %436 = vmatmul.mubr.bf16.gmra.mrb[0].mxu0 %v346
        %v437 = vpop.f32.mrb[0].mxu0
        %v438 = vadd.f32 0.0, %v437
        %v439 = vpop.f32.mrb[0].mxu0
        %v440 = vpop.f32.mrb[0].mxu0
        %v441 = vadd.f32 0.0, %v440
        %v442 = vpop.f32.mrb[0].mxu0
        %443 = vmatprep.mubr.bf16.mxu0 0
        %444 = vmatmul.mubr.bf16.gmra.mrb[0].mxu0 %v349
        %v445 = vpop.f32.mrb[0].mxu0
        %v446 = vadd.f32 0.0, %v445
        %v447 = vpop.f32.mrb[0].mxu0
        %v448 = vpop.f32.mrb[0].mxu0
        %v449 = vadd.f32 0.0, %v448
        %v450 = vpop.f32.mrb[0].mxu0
        %451 = vdwg.mxu0
        %v452 = vsel %vm326, %v248, 0
        %v454 = vsel %vm326, %v249, 0
        %v456 = vsel %vm326, %v250, 0
        %v458 = vsel %vm326, %v251, 0
        %v460 = vsel %vm326, %v252, 0
        %v462 = vsel %vm326, %v253, 0
        %v464 = vsel %vm326, %v254, 0
        %v466 = vsel %vm326, %v255, 0
        %v469 = vsel %vm351, %v211, 0
        %471 = vmatprep.subr.bf16.mxu0 0
        %472 = vmatpush1.bf16.msra.mxu0 %v469
        %473 = vmatprep.subr.bf16.mxu0 0
        %474 = vmatpush1.bf16.msra.mxu0 0
        %475 = vmatprep.subr.bf16.mxu0 0
        %476 = vmatpush1.bf16.msra.mxu0 0
        %477 = vmatprep.subr.bf16.mxu0 0
        %478 = vmatpush1.bf16.msra.mxu0 0
        %479 = vmatprep.subr.bf16.mxu0 0
        %480 = vmatpush1.bf16.msra.mxu0 0
        %481 = vmatprep.subr.bf16.mxu0 0
        %482 = vmatpush1.bf16.msra.mxu0 0
        %483 = vmatprep.subr.bf16.mxu0 0
        %484 = vmatpush1.bf16.msra.mxu0 0
        %485 = vmatprep.subr.bf16.mxu0 0
        %486 = vmatpush1.bf16.msra.mxu0 0
        %487 = vmatprep.subr.bf16.mxu0 0
        %488 = vmatpush1.bf16.msra.mxu0 0
        %489 = vmatprep.subr.bf16.mxu0 0
        %490 = vmatpush1.bf16.msra.mxu0 0
        %491 = vmatprep.subr.bf16.mxu0 0
        %492 = vmatpush1.bf16.msra.mxu0 0
        %493 = vmatprep.subr.bf16.mxu0 0
        %494 = vmatpush1.bf16.msra.mxu0 0
        %495 = vmatprep.subr.bf16.mxu0 0
        %496 = vmatpush1.bf16.msra.mxu0 0
        %497 = vmatprep.subr.bf16.mxu0 0
        %498 = vmatpush1.bf16.msra.mxu0 0
        %499 = vmatprep.subr.bf16.mxu0 0
        %500 = vmatpush1.bf16.msra.mxu0 0
        %501 = vmatprep.subr.bf16.mxu0 0
        %502 = vmatpush1.bf16.msra.mxu0 0
        %503 = vmatprep.mubr.bf16.mxu0 0
        %504 = vmatmul.mubr.bf16.gmra.mrb[0].mxu0 %v452
        %v505 = vpop.f32.mrb[0].mxu0
        %v506 = vadd.f32 %v390, %v505
        %v507 = vpop.f32.mrb[0].mxu0
        %v508 = vpop.f32.mrb[0].mxu0
        %v509 = vadd.f32 %v393, %v508
        %v510 = vpop.f32.mrb[0].mxu0
        %511 = vmatprep.mubr.bf16.mxu0 0
        %512 = vmatmul.mubr.bf16.gmra.mrb[0].mxu0 %v454
        %v513 = vpop.f32.mrb[0].mxu0
        %v514 = vadd.f32 %v398, %v513
        %v515 = vpop.f32.mrb[0].mxu0
        %v516 = vpop.f32.mrb[0].mxu0
        %v517 = vadd.f32 %v401, %v516
        %v518 = vpop.f32.mrb[0].mxu0
        %519 = vmatprep.mubr.bf16.mxu0 0
        %520 = vmatmul.mubr.bf16.gmra.mrb[0].mxu0 %v456
        %v521 = vpop.f32.mrb[0].mxu0
        %v522 = vadd.f32 %v406, %v521
        %v523 = vpop.f32.mrb[0].mxu0
        %v524 = vpop.f32.mrb[0].mxu0
        %v525 = vadd.f32 %v409, %v524
        %v526 = vpop.f32.mrb[0].mxu0
        %527 = vmatprep.mubr.bf16.mxu0 0
        %528 = vmatmul.mubr.bf16.gmra.mrb[0].mxu0 %v458
        %v529 = vpop.f32.mrb[0].mxu0
        %v530 = vadd.f32 %v414, %v529
        %v531 = vpop.f32.mrb[0].mxu0
        %v532 = vpop.f32.mrb[0].mxu0
        %v533 = vadd.f32 %v417, %v532
        %v534 = vpop.f32.mrb[0].mxu0
        %535 = vmatprep.mubr.bf16.mxu0 0
        %536 = vmatmul.mubr.bf16.gmra.mrb[0].mxu0 %v460
        %v537 = vpop.f32.mrb[0].mxu0
        %v538 = vadd.f32 %v422, %v537
        %v539 = vpop.f32.mrb[0].mxu0
        %v540 = vpop.f32.mrb[0].mxu0
        %v541 = vadd.f32 %v425, %v540
        %v542 = vpop.f32.mrb[0].mxu0
        %543 = vmatprep.mubr.bf16.mxu0 0
        %544 = vmatmul.mubr.bf16.gmra.mrb[0].mxu0 %v462
        %v545 = vpop.f32.mrb[0].mxu0
        %v546 = vadd.f32 %v430, %v545
        %v547 = vpop.f32.mrb[0].mxu0
        %v548 = vpop.f32.mrb[0].mxu0
        %v549 = vadd.f32 %v433, %v548
        %v550 = vpop.f32.mrb[0].mxu0
        %551 = vmatprep.mubr.bf16.mxu0 0
        %552 = vmatmul.mubr.bf16.gmra.mrb[0].mxu0 %v464
        %v553 = vpop.f32.mrb[0].mxu0
        %v554 = vadd.f32 %v438, %v553
        %v555 = vpop.f32.mrb[0].mxu0
        %v556 = vpop.f32.mrb[0].mxu0
        %v557 = vadd.f32 %v441, %v556
        %v558 = vpop.f32.mrb[0].mxu0
        %559 = vmatprep.mubr.bf16.mxu0 0
        %560 = vmatmul.mubr.bf16.gmra.mrb[0].mxu0 %v466
        %v561 = vpop.f32.mrb[0].mxu0
        %v562 = vadd.f32 %v446, %v561
        %v563 = vpop.f32.mrb[0].mxu0
        %v564 = vpop.f32.mrb[0].mxu0
        %v565 = vadd.f32 %v449, %v564
        %v566 = vpop.f32.mrb[0].mxu0
        %567 = vdwg.mxu0
        %s568 = scalar_lea.vmem %s1, 4
        %v569 = vld [vmem:[%s568] sm:$0x3]
        %vm570 = vcmask 1046528
        %v571 = vrot.slane %v248, 1
        %v572 = vrot.slane %v249, 1
        %v573 = vsel %vm570, %v571, %v572
        %v574 = vrot.slane %v250, 1
        %v575 = vsel %vm570, %v572, %v574
        %v576 = vrot.slane %v251, 1
        %v577 = vsel %vm570, %v574, %v576
        %v578 = vrot.slane %v252, 1
        %v579 = vsel %vm570, %v576, %v578
        %v580 = vrot.slane %v253, 1
        %v581 = vsel %vm570, %v578, %v580
        %v582 = vrot.slane %v254, 1
        %v583 = vsel %vm570, %v580, %v582
        %v584 = vrot.slane %v255, 1
        %v585 = vsel %vm570, %v582, %v584
        %v586 = vrot.slane %v256, 1
        %v587 = vsel %vm570, %v584, %v586
        %v589 = vsel %vm326, %v573, 0
        %v592 = vsel %vm326, %v575, 0
        %v595 = vsel %vm326, %v577, 0
        %v598 = vsel %vm326, %v579, 0
        %v601 = vsel %vm326, %v581, 0
        %v604 = vsel %vm326, %v583, 0
        %v607 = vsel %vm326, %v585, 0
        %v610 = vsel %vm326, %v587, 0
        %v613 = vsel %vm351, %v569, 0
        %615 = vmatprep.subr.bf16.mxu0 0
        %616 = vmatpush1.bf16.msra.mxu0 %v613
        %617 = vmatprep.subr.bf16.mxu0 0
        %618 = vmatpush1.bf16.msra.mxu0 0
        %619 = vmatprep.subr.bf16.mxu0 0
        %620 = vmatpush1.bf16.msra.mxu0 0
        %621 = vmatprep.subr.bf16.mxu0 0
        %622 = vmatpush1.bf16.msra.mxu0 0
        %623 = vmatprep.subr.bf16.mxu0 0
        %624 = vmatpush1.bf16.msra.mxu0 0
        %625 = vmatprep.subr.bf16.mxu0 0
        %626 = vmatpush1.bf16.msra.mxu0 0
        %627 = vmatprep.subr.bf16.mxu0 0
        %628 = vmatpush1.bf16.msra.mxu0 0
        %629 = vmatprep.subr.bf16.mxu0 0
        %630 = vmatpush1.bf16.msra.mxu0 0
        %631 = vmatprep.subr.bf16.mxu0 0
        %632 = vmatpush1.bf16.msra.mxu0 0
        %633 = vmatprep.subr.bf16.mxu0 0
        %634 = vmatpush1.bf16.msra.mxu0 0
        %635 = vmatprep.subr.bf16.mxu0 0
        %636 = vmatpush1.bf16.msra.mxu0 0
        %637 = vmatprep.subr.bf16.mxu0 0
        %638 = vmatpush1.bf16.msra.mxu0 0
        %639 = vmatprep.subr.bf16.mxu0 0
        %640 = vmatpush1.bf16.msra.mxu0 0
        %641 = vmatprep.subr.bf16.mxu0 0
        %642 = vmatpush1.bf16.msra.mxu0 0
        %643 = vmatprep.subr.bf16.mxu0 0
        %644 = vmatpush1.bf16.msra.mxu0 0
        %645 = vmatprep.subr.bf16.mxu0 0
        %646 = vmatpush1.bf16.msra.mxu0 0
        %647 = vmatprep.mubr.bf16.mxu0 0
        %648 = vmatmul.mubr.bf16.gmra.mrb[0].mxu0 %v589
        %v649 = vpop.f32.mrb[0].mxu0
        %v650 = vadd.f32 0.0, %v649
        %v651 = vpop.f32.mrb[0].mxu0
        %v652 = vpop.f32.mrb[0].mxu0
        %v653 = vadd.f32 0.0, %v652
        %v654 = vpop.f32.mrb[0].mxu0
        %655 = vmatprep.mubr.bf16.mxu0 0
        %656 = vmatmul.mubr.bf16.gmra.mrb[0].mxu0 %v592
        %v657 = vpop.f32.mrb[0].mxu0
        %v658 = vadd.f32 0.0, %v657
        %v659 = vpop.f32.mrb[0].mxu0
        %v660 = vpop.f32.mrb[0].mxu0
        %v661 = vadd.f32 0.0, %v660
        %v662 = vpop.f32.mrb[0].mxu0
        %663 = vmatprep.mubr.bf16.mxu0 0
        %664 = vmatmul.mubr.bf16.gmra.mrb[0].mxu0 %v595
        %v665 = vpop.f32.mrb[0].mxu0
        %v666 = vadd.f32 0.0, %v665
        %v667 = vpop.f32.mrb[0].mxu0
        %v668 = vpop.f32.mrb[0].mxu0
        %v669 = vadd.f32 0.0, %v668
        %v670 = vpop.f32.mrb[0].mxu0
        %671 = vmatprep.mubr.bf16.mxu0 0
        %672 = vmatmul.mubr.bf16.gmra.mrb[0].mxu0 %v598
        %v673 = vpop.f32.mrb[0].mxu0
        %v674 = vadd.f32 0.0, %v673
        %v675 = vpop.f32.mrb[0].mxu0
        %v676 = vpop.f32.mrb[0].mxu0
        %v677 = vadd.f32 0.0, %v676
        %v678 = vpop.f32.mrb[0].mxu0
        %679 = vmatprep.mubr.bf16.mxu0 0
        %680 = vmatmul.mubr.bf16.gmra.mrb[0].mxu0 %v601
        %v681 = vpop.f32.mrb[0].mxu0
        %v682 = vadd.f32 0.0, %v681
        %v683 = vpop.f32.mrb[0].mxu0
        %v684 = vpop.f32.mrb[0].mxu0
        %v685 = vadd.f32 0.0, %v684
        %v686 = vpop.f32.mrb[0].mxu0
        %687 = vmatprep.mubr.bf16.mxu0 0
        %688 = vmatmul.mubr.bf16.gmra.mrb[0].mxu0 %v604
        %v689 = vpop.f32.mrb[0].mxu0
        %v690 = vadd.f32 0.0, %v689
        %v691 = vpop.f32.mrb[0].mxu0
        %v692 = vpop.f32.mrb[0].mxu0
        %v693 = vadd.f32 0.0, %v692
        %v694 = vpop.f32.mrb[0].mxu0
        %695 = vmatprep.mubr.bf16.mxu0 0
        %696 = vmatmul.mubr.bf16.gmra.mrb[0].mxu0 %v607
        %v697 = vpop.f32.mrb[0].mxu0
        %v698 = vadd.f32 0.0, %v697
        %v699 = vpop.f32.mrb[0].mxu0
        %v700 = vpop.f32.mrb[0].mxu0
        %v701 = vadd.f32 0.0, %v700
        %v702 = vpop.f32.mrb[0].mxu0
        %703 = vmatprep.mubr.bf16.mxu0 0
        %704 = vmatmul.mubr.bf16.gmra.mrb[0].mxu0 %v610
        %v705 = vpop.f32.mrb[0].mxu0
        %v706 = vadd.f32 0.0, %v705
        %v707 = vpop.f32.mrb[0].mxu0
        %v708 = vpop.f32.mrb[0].mxu0
        %v709 = vadd.f32 0.0, %v708
        %v710 = vpop.f32.mrb[0].mxu0
        %711 = vdwg.mxu0
        %v712 = vadd.f32 %v506, %v650
        %v713 = vadd.f32 %v509, %v653
        %v714 = vadd.f32 %v514, %v658
        %v715 = vadd.f32 %v517, %v661
        %v716 = vadd.f32 %v522, %v666
        %v717 = vadd.f32 %v525, %v669
        %v718 = vadd.f32 %v530, %v674
        %v719 = vadd.f32 %v533, %v677
        %v720 = vadd.f32 %v538, %v682
        %v721 = vadd.f32 %v541, %v685
        %v722 = vadd.f32 %v546, %v690
        %v723 = vadd.f32 %v549, %v693
        %v724 = vadd.f32 %v554, %v698
        %v725 = vadd.f32 %v557, %v701
        %v726 = vadd.f32 %v562, %v706
        %v727 = vadd.f32 %v565, %v709
        %s728 = scalar_lea.vmem %s1, 6
        %v729 = vld [vmem:[%s728] sm:$0x3]
        %v732 = vunpack.c.l.b16 %v207
        %v733 = vunpack.c.l.b16 %v208
        %v734 = vpack.c.b16 %v732, %v247
        %v735 = vpack.c.b16 %v733, %v733
        %v736 = vrot.slane %v734, 1
        %v737 = vsel %vm570, %v584, %v736
        %v738 = vrot.slane %v735, 1
        %v739 = vsel %vm570, %v736, %v738
        %v741 = vsel %vm326, %v737, 0
        %v744 = vsel %vm326, %v739, 0
        %v747 = vsel %vm351, %v729, 0
        %749 = vmatprep.subr.bf16.mxu0 0
        %750 = vmatpush1.bf16.msra.mxu0 %v747
        %751 = vmatprep.subr.bf16.mxu0 0
        %752 = vmatpush1.bf16.msra.mxu0 0
        %753 = vmatprep.subr.bf16.mxu0 0
        %754 = vmatpush1.bf16.msra.mxu0 0
        %755 = vmatprep.subr.bf16.mxu0 0
        %756 = vmatpush1.bf16.msra.mxu0 0
        %757 = vmatprep.subr.bf16.mxu0 0
        %758 = vmatpush1.bf16.msra.mxu0 0
        %759 = vmatprep.subr.bf16.mxu0 0
        %760 = vmatpush1.bf16.msra.mxu0 0
        %761 = vmatprep.subr.bf16.mxu0 0
        %762 = vmatpush1.bf16.msra.mxu0 0
        %763 = vmatprep.subr.bf16.mxu0 0
        %764 = vmatpush1.bf16.msra.mxu0 0
        %765 = vmatprep.subr.bf16.mxu0 0
        %766 = vmatpush1.bf16.msra.mxu0 0
        %767 = vmatprep.subr.bf16.mxu0 0
        %768 = vmatpush1.bf16.msra.mxu0 0
        %769 = vmatprep.subr.bf16.mxu0 0
        %770 = vmatpush1.bf16.msra.mxu0 0
        %771 = vmatprep.subr.bf16.mxu0 0
        %772 = vmatpush1.bf16.msra.mxu0 0
        %773 = vmatprep.subr.bf16.mxu0 0
        %774 = vmatpush1.bf16.msra.mxu0 0
        %775 = vmatprep.subr.bf16.mxu0 0
        %776 = vmatpush1.bf16.msra.mxu0 0
        %777 = vmatprep.subr.bf16.mxu0 0
        %778 = vmatpush1.bf16.msra.mxu0 0
        %779 = vmatprep.subr.bf16.mxu0 0
        %780 = vmatpush1.bf16.msra.mxu0 0
        %781 = vmatprep.mubr.bf16.mxu0 0
        %782 = vmatmul.mubr.bf16.gmra.mrb[0].mxu0 %v592
        %v783 = vpop.f32.mrb[0].mxu0
        %v784 = vadd.f32 0.0, %v783
        %v785 = vpop.f32.mrb[0].mxu0
        %v786 = vpop.f32.mrb[0].mxu0
        %v787 = vadd.f32 0.0, %v786
        %v788 = vpop.f32.mrb[0].mxu0
        %789 = vmatprep.mubr.bf16.mxu0 0
        %790 = vmatmul.mubr.bf16.gmra.mrb[0].mxu0 %v595
        %v791 = vpop.f32.mrb[0].mxu0
        %v792 = vadd.f32 0.0, %v791
        %v793 = vpop.f32.mrb[0].mxu0
        %v794 = vpop.f32.mrb[0].mxu0
        %v795 = vadd.f32 0.0, %v794
        %v796 = vpop.f32.mrb[0].mxu0
        %797 = vmatprep.mubr.bf16.mxu0 0
        %798 = vmatmul.mubr.bf16.gmra.mrb[0].mxu0 %v598
        %v799 = vpop.f32.mrb[0].mxu0
        %v800 = vadd.f32 0.0, %v799
        %v801 = vpop.f32.mrb[0].mxu0
        %v802 = vpop.f32.mrb[0].mxu0
        %v803 = vadd.f32 0.0, %v802
        %v804 = vpop.f32.mrb[0].mxu0
        %805 = vmatprep.mubr.bf16.mxu0 0
        %806 = vmatmul.mubr.bf16.gmra.mrb[0].mxu0 %v601
        %v807 = vpop.f32.mrb[0].mxu0
        %v808 = vadd.f32 0.0, %v807
        %v809 = vpop.f32.mrb[0].mxu0
        %v810 = vpop.f32.mrb[0].mxu0
        %v811 = vadd.f32 0.0, %v810
        %v812 = vpop.f32.mrb[0].mxu0
        %813 = vmatprep.mubr.bf16.mxu0 0
        %814 = vmatmul.mubr.bf16.gmra.mrb[0].mxu0 %v604
        %v815 = vpop.f32.mrb[0].mxu0
        %v816 = vadd.f32 0.0, %v815
        %v817 = vpop.f32.mrb[0].mxu0
        %v818 = vpop.f32.mrb[0].mxu0
        %v819 = vadd.f32 0.0, %v818
        %v820 = vpop.f32.mrb[0].mxu0
        %821 = vmatprep.mubr.bf16.mxu0 0
        %822 = vmatmul.mubr.bf16.gmra.mrb[0].mxu0 %v607
        %v823 = vpop.f32.mrb[0].mxu0
        %v824 = vadd.f32 0.0, %v823
        %v825 = vpop.f32.mrb[0].mxu0
        %v826 = vpop.f32.mrb[0].mxu0
        %v827 = vadd.f32 0.0, %v826
        %v828 = vpop.f32.mrb[0].mxu0
        %829 = vmatprep.mubr.bf16.mxu0 0
        %830 = vmatmul.mubr.bf16.gmra.mrb[0].mxu0 %v741
        %v831 = vpop.f32.mrb[0].mxu0
        %v832 = vadd.f32 0.0, %v831
        %v833 = vpop.f32.mrb[0].mxu0
        %v834 = vpop.f32.mrb[0].mxu0
        %v835 = vadd.f32 0.0, %v834
        %v836 = vpop.f32.mrb[0].mxu0
        %837 = vmatprep.mubr.bf16.mxu0 0
        %838 = vmatmul.mubr.bf16.gmra.mrb[0].mxu0 %v744
        %v839 = vpop.f32.mrb[0].mxu0
        %v840 = vadd.f32 0.0, %v839
        %v841 = vpop.f32.mrb[0].mxu0
        %v842 = vpop.f32.mrb[0].mxu0
        %v843 = vadd.f32 0.0, %v842
        %v844 = vpop.f32.mrb[0].mxu0
        %845 = vdwg.mxu0
        %v846 = vadd.f32 %v712, %v784
        %v847 = vadd.f32 %v713, %v787
        %v848 = vadd.f32 %v714, %v792
        %v849 = vadd.f32 %v715, %v795
        %v850 = vadd.f32 %v716, %v800
        %v851 = vadd.f32 %v717, %v803
        %v852 = vadd.f32 %v718, %v808
        %v853 = vadd.f32 %v719, %v811
        %v854 = vadd.f32 %v720, %v816
        %v855 = vadd.f32 %v721, %v819
        %v856 = vadd.f32 %v722, %v824
        %v857 = vadd.f32 %v723, %v827
        %v858 = vadd.f32 %v724, %v832
        %v859 = vadd.f32 %v725, %v835
        %v860 = vadd.f32 %v726, %v840
        %v861 = vadd.f32 %v727, %v843
        %s862 = scalar_lea.vmem %s1, 8
        %v863 = vld [vmem:[%s862] sm:$0x3]
        %vm864 = vsmask.f32 6400
        %v865 = vrot.slane %v270, 1
        %v866 = vrot.slane %v266, 2
        %v867 = vor.u32 %v865, %v866
        %v868 = vrot.slane %v278, 1
        %v869 = vrot.slane %v274, 2
        %v870 = vor.u32 %v868, %v869
        %v871 = vsel %vm864, %v867, %v870
        %v872 = vrot.slane %v286, 1
        %v873 = vrot.slane %v282, 2
        %v874 = vor.u32 %v872, %v873
        %v875 = vsel %vm864, %v870, %v874
        %v876 = vrot.slane %v294, 1
        %v877 = vrot.slane %v290, 2
        %v878 = vor.u32 %v876, %v877
        %v879 = vsel %vm864, %v874, %v878
        %v880 = vrot.slane %v302, 1
        %v881 = vrot.slane %v298, 2
        %v882 = vor.u32 %v880, %v881
        %v883 = vsel %vm864, %v878, %v882
        %v884 = vrot.slane %v310, 1
        %v885 = vrot.slane %v306, 2
        %v886 = vor.u32 %v884, %v885
        %v887 = vsel %vm864, %v882, %v886
        %v888 = vrot.slane %v318, 1
        %v889 = vrot.slane %v314, 2
        %v890 = vor.u32 %v888, %v889
        %v891 = vsel %vm864, %v886, %v890
        %v893 = vshrl.u32 %v734, 16
        %v895 = vrot.slane %v893, 1
        %v896 = vshll.u32 %v734, 16
        %v898 = vrot.slane %v896, 2
        %v899 = vor.u32 %v895, %v898
        %v900 = vsel %vm864, %v890, %v899
        %v902 = vshrl.u32 %v735, 16
        %v904 = vrot.slane %v902, 1
        %v905 = vshll.u32 %v735, 16
        %v907 = vrot.slane %v905, 2
        %v908 = vor.u32 %v904, %v907
        %v909 = vsel %vm864, %v899, %v908
        %v911 = vsel %vm326, %v871, 0
        %v914 = vsel %vm326, %v875, 0
        %v917 = vsel %vm326, %v879, 0
        %v920 = vsel %vm326, %v883, 0
        %v923 = vsel %vm326, %v887, 0
        %v926 = vsel %vm326, %v891, 0
        %v929 = vsel %vm326, %v900, 0
        %v932 = vsel %vm326, %v909, 0
        %v935 = vsel %vm351, %v863, 0
        %937 = vmatprep.subr.bf16.mxu0 0
        %938 = vmatpush1.bf16.msra.mxu0 %v935
        %939 = vmatprep.subr.bf16.mxu0 0
        %940 = vmatpush1.bf16.msra.mxu0 0
        %941 = vmatprep.subr.bf16.mxu0 0
        %942 = vmatpush1.bf16.msra.mxu0 0
        %943 = vmatprep.subr.bf16.mxu0 0
        %944 = vmatpush1.bf16.msra.mxu0 0
        %945 = vmatprep.subr.bf16.mxu0 0
        %946 = vmatpush1.bf16.msra.mxu0 0
        %947 = vmatprep.subr.bf16.mxu0 0
        %948 = vmatpush1.bf16.msra.mxu0 0
        %949 = vmatprep.subr.bf16.mxu0 0
        %950 = vmatpush1.bf16.msra.mxu0 0
        %951 = vmatprep.subr.bf16.mxu0 0
        %952 = vmatpush1.bf16.msra.mxu0 0
        %953 = vmatprep.subr.bf16.mxu0 0
        %954 = vmatpush1.bf16.msra.mxu0 0
        %955 = vmatprep.subr.bf16.mxu0 0
        %956 = vmatpush1.bf16.msra.mxu0 0
        %957 = vmatprep.subr.bf16.mxu0 0
        %958 = vmatpush1.bf16.msra.mxu0 0
        %959 = vmatprep.subr.bf16.mxu0 0
        %960 = vmatpush1.bf16.msra.mxu0 0
        %961 = vmatprep.subr.bf16.mxu0 0
        %962 = vmatpush1.bf16.msra.mxu0 0
        %963 = vmatprep.subr.bf16.mxu0 0
        %964 = vmatpush1.bf16.msra.mxu0 0
        %965 = vmatprep.subr.bf16.mxu0 0
        %966 = vmatpush1.bf16.msra.mxu0 0
        %967 = vmatprep.subr.bf16.mxu0 0
        %968 = vmatpush1.bf16.msra.mxu0 0
        %969 = vmatprep.mubr.bf16.mxu0 0
        %970 = vmatmul.mubr.bf16.gmra.mrb[0].mxu0 %v911
        %v971 = vpop.f32.mrb[0].mxu0
        %v972 = vadd.f32 0.0, %v971
        %v973 = vpop.f32.mrb[0].mxu0
        %v974 = vpop.f32.mrb[0].mxu0
        %v975 = vadd.f32 0.0, %v974
        %v976 = vpop.f32.mrb[0].mxu0
        %977 = vmatprep.mubr.bf16.mxu0 0
        %978 = vmatmul.mubr.bf16.gmra.mrb[0].mxu0 %v914
        %v979 = vpop.f32.mrb[0].mxu0
        %v980 = vadd.f32 0.0, %v979
        %v981 = vpop.f32.mrb[0].mxu0
        %v982 = vpop.f32.mrb[0].mxu0
        %v983 = vadd.f32 0.0, %v982
        %v984 = vpop.f32.mrb[0].mxu0
        %985 = vmatprep.mubr.bf16.mxu0 0
        %986 = vmatmul.mubr.bf16.gmra.mrb[0].mxu0 %v917
        %v987 = vpop.f32.mrb[0].mxu0
        %v988 = vadd.f32 0.0, %v987
        %v989 = vpop.f32.mrb[0].mxu0
        %v990 = vpop.f32.mrb[0].mxu0
        %v991 = vadd.f32 0.0, %v990
        %v992 = vpop.f32.mrb[0].mxu0
        %993 = vmatprep.mubr.bf16.mxu0 0
        %994 = vmatmul.mubr.bf16.gmra.mrb[0].mxu0 %v920
        %v995 = vpop.f32.mrb[0].mxu0
        %v996 = vadd.f32 0.0, %v995
        %v997 = vpop.f32.mrb[0].mxu0
        %v998 = vpop.f32.mrb[0].mxu0
        %v999 = vadd.f32 0.0, %v998
        %v1000 = vpop.f32.mrb[0].mxu0
        %1001 = vmatprep.mubr.bf16.mxu0 0
        %1002 = vmatmul.mubr.bf16.gmra.mrb[0].mxu0 %v923
        %v1003 = vpop.f32.mrb[0].mxu0
        %v1004 = vadd.f32 0.0, %v1003
        %v1005 = vpop.f32.mrb[0].mxu0
        %v1006 = vpop.f32.mrb[0].mxu0
        %v1007 = vadd.f32 0.0, %v1006
        %v1008 = vpop.f32.mrb[0].mxu0
        %1009 = vmatprep.mubr.bf16.mxu0 0
        %1010 = vmatmul.mubr.bf16.gmra.mrb[0].mxu0 %v926
        %v1011 = vpop.f32.mrb[0].mxu0
        %v1012 = vadd.f32 0.0, %v1011
        %v1013 = vpop.f32.mrb[0].mxu0
        %v1014 = vpop.f32.mrb[0].mxu0
        %v1015 = vadd.f32 0.0, %v1014
        %v1016 = vpop.f32.mrb[0].mxu0
        %1017 = vmatprep.mubr.bf16.mxu0 0
        %1018 = vmatmul.mubr.bf16.gmra.mrb[0].mxu0 %v929
        %v1019 = vpop.f32.mrb[0].mxu0
        %v1020 = vadd.f32 0.0, %v1019
        %v1021 = vpop.f32.mrb[0].mxu0
        %v1022 = vpop.f32.mrb[0].mxu0
        %v1023 = vadd.f32 0.0, %v1022
        %v1024 = vpop.f32.mrb[0].mxu0
        %1025 = vmatprep.mubr.bf16.mxu0 0
        %1026 = vmatmul.mubr.bf16.gmra.mrb[0].mxu0 %v932
        %v1027 = vpop.f32.mrb[0].mxu0
        %v1028 = vadd.f32 0.0, %v1027
        %v1029 = vpop.f32.mrb[0].mxu0
        %v1030 = vpop.f32.mrb[0].mxu0
        %v1031 = vadd.f32 0.0, %v1030
        %v1032 = vpop.f32.mrb[0].mxu0
        %1033 = vdwg.mxu0
        %v1034 = vadd.f32 %v846, %v972
        %v1035 = vadd.f32 %v847, %v975
        %v1036 = vadd.f32 %v848, %v980
        %v1037 = vadd.f32 %v849, %v983
        %v1038 = vadd.f32 %v850, %v988
        %v1039 = vadd.f32 %v851, %v991
        %v1040 = vadd.f32 %v852, %v996
        %v1041 = vadd.f32 %v853, %v999
        %v1042 = vadd.f32 %v854, %v1004
        %v1043 = vadd.f32 %v855, %v1007
        %v1044 = vadd.f32 %v856, %v1012
        %v1045 = vadd.f32 %v857, %v1015
        %v1046 = vadd.f32 %v858, %v1020
        %v1047 = vadd.f32 %v859, %v1023
        %v1048 = vadd.f32 %v860, %v1028
        %v1049 = vadd.f32 %v861, %v1031
        %s1050 = scalar_lea.vmem %s1, 10
        %v1051 = vld [vmem:[%s1050] sm:$0x3]
        %vm1052 = vcmask 1045504
        %v1053 = vrot.slane %v249, 2
        %v1054 = vrot.slane %v250, 2
        %v1055 = vsel %vm1052, %v1053, %v1054
        %v1056 = vrot.slane %v251, 2
        %v1057 = vsel %vm1052, %v1054, %v1056
        %v1058 = vrot.slane %v252, 2
        %v1059 = vsel %vm1052, %v1056, %v1058
        %v1060 = vrot.slane %v253, 2
        %v1061 = vsel %vm1052, %v1058, %v1060
        %v1062 = vrot.slane %v254, 2
        %v1063 = vsel %vm1052, %v1060, %v1062
        %v1064 = vrot.slane %v255, 2
        %v1065 = vsel %vm1052, %v1062, %v1064
        %v1066 = vrot.slane %v734, 2
        %v1067 = vsel %vm1052, %v1064, %v1066
        %v1068 = vrot.slane %v735, 2
        %v1069 = vsel %vm1052, %v1066, %v1068
        %v1071 = vsel %vm326, %v1055, 0
        %v1074 = vsel %vm326, %v1057, 0
        %v1077 = vsel %vm326, %v1059, 0
        %v1080 = vsel %vm326, %v1061, 0
        %v1083 = vsel %vm326, %v1063, 0
        %v1086 = vsel %vm326, %v1065, 0
        %v1089 = vsel %vm326, %v1067, 0
        %v1092 = vsel %vm326, %v1069, 0
        %v1095 = vsel %vm351, %v1051, 0
        %1097 = vmatprep.subr.bf16.mxu0 0
        %1098 = vmatpush1.bf16.msra.mxu0 %v1095
        %1099 = vmatprep.subr.bf16.mxu0 0
        %1100 = vmatpush1.bf16.msra.mxu0 0
        %1101 = vmatprep.subr.bf16.mxu0 0
        %1102 = vmatpush1.bf16.msra.mxu0 0
        %1103 = vmatprep.subr.bf16.mxu0 0
        %1104 = vmatpush1.bf16.msra.mxu0 0
        %1105 = vmatprep.subr.bf16.mxu0 0
        %1106 = vmatpush1.bf16.msra.mxu0 0
        %1107 = vmatprep.subr.bf16.mxu0 0
        %1108 = vmatpush1.bf16.msra.mxu0 0
        %1109 = vmatprep.subr.bf16.mxu0 0
        %1110 = vmatpush1.bf16.msra.mxu0 0
        %1111 = vmatprep.subr.bf16.mxu0 0
        %1112 = vmatpush1.bf16.msra.mxu0 0
        %1113 = vmatprep.subr.bf16.mxu0 0
        %1114 = vmatpush1.bf16.msra.mxu0 0
        %1115 = vmatprep.subr.bf16.mxu0 0
        %1116 = vmatpush1.bf16.msra.mxu0 0
        %1117 = vmatprep.subr.bf16.mxu0 0
        %1118 = vmatpush1.bf16.msra.mxu0 0
        %1119 = vmatprep.subr.bf16.mxu0 0
        %1120 = vmatpush1.bf16.msra.mxu0 0
        %1121 = vmatprep.subr.bf16.mxu0 0
        %1122 = vmatpush1.bf16.msra.mxu0 0
        %1123 = vmatprep.subr.bf16.mxu0 0
        %1124 = vmatpush1.bf16.msra.mxu0 0
        %1125 = vmatprep.subr.bf16.mxu0 0
        %1126 = vmatpush1.bf16.msra.mxu0 0
        %1127 = vmatprep.subr.bf16.mxu0 0
        %1128 = vmatpush1.bf16.msra.mxu0 0
        %1129 = vmatprep.mubr.bf16.mxu0 0
        %1130 = vmatmul.mubr.bf16.gmra.mrb[0].mxu0 %v1071
        %v1131 = vpop.f32.mrb[0].mxu0
        %v1132 = vadd.f32 0.0, %v1131
        %v1133 = vpop.f32.mrb[0].mxu0
        %v1134 = vpop.f32.mrb[0].mxu0
        %v1135 = vadd.f32 0.0, %v1134
        %v1136 = vpop.f32.mrb[0].mxu0
        %1137 = vmatprep.mubr.bf16.mxu0 0
        %1138 = vmatmul.mubr.bf16.gmra.mrb[0].mxu0 %v1074
        %v1139 = vpop.f32.mrb[0].mxu0
        %v1140 = vadd.f32 0.0, %v1139
        %v1141 = vpop.f32.mrb[0].mxu0
        %v1142 = vpop.f32.mrb[0].mxu0
        %v1143 = vadd.f32 0.0, %v1142
        %v1144 = vpop.f32.mrb[0].mxu0
        %1145 = vmatprep.mubr.bf16.mxu0 0
        %1146 = vmatmul.mubr.bf16.gmra.mrb[0].mxu0 %v1077
        %v1147 = vpop.f32.mrb[0].mxu0
        %v1148 = vadd.f32 0.0, %v1147
        %v1149 = vpop.f32.mrb[0].mxu0
        %v1150 = vpop.f32.mrb[0].mxu0
        %v1151 = vadd.f32 0.0, %v1150
        %v1152 = vpop.f32.mrb[0].mxu0
        %1153 = vmatprep.mubr.bf16.mxu0 0
        %1154 = vmatmul.mubr.bf16.gmra.mrb[0].mxu0 %v1080
        %v1155 = vpop.f32.mrb[0].mxu0
        %v1156 = vadd.f32 0.0, %v1155
        %v1157 = vpop.f32.mrb[0].mxu0
        %v1158 = vpop.f32.mrb[0].mxu0
        %v1159 = vadd.f32 0.0, %v1158
        %v1160 = vpop.f32.mrb[0].mxu0
        %1161 = vmatprep.mubr.bf16.mxu0 0
        %1162 = vmatmul.mubr.bf16.gmra.mrb[0].mxu0 %v1083
        %v1163 = vpop.f32.mrb[0].mxu0
        %v1164 = vadd.f32 0.0, %v1163
        %v1165 = vpop.f32.mrb[0].mxu0
        %v1166 = vpop.f32.mrb[0].mxu0
        %v1167 = vadd.f32 0.0, %v1166
        %v1168 = vpop.f32.mrb[0].mxu0
        %1169 = vmatprep.mubr.bf16.mxu0 0
        %1170 = vmatmul.mubr.bf16.gmra.mrb[0].mxu0 %v1086
        %v1171 = vpop.f32.mrb[0].mxu0
        %v1172 = vadd.f32 0.0, %v1171
        %v1173 = vpop.f32.mrb[0].mxu0
        %v1174 = vpop.f32.mrb[0].mxu0
        %v1175 = vadd.f32 0.0, %v1174
        %v1176 = vpop.f32.mrb[0].mxu0
        %1177 = vmatprep.mubr.bf16.mxu0 0
        %1178 = vmatmul.mubr.bf16.gmra.mrb[0].mxu0 %v1089
        %v1179 = vpop.f32.mrb[0].mxu0
        %v1180 = vadd.f32 0.0, %v1179
        %v1181 = vpop.f32.mrb[0].mxu0
        %v1182 = vpop.f32.mrb[0].mxu0
        %v1183 = vadd.f32 0.0, %v1182
        %v1184 = vpop.f32.mrb[0].mxu0
        %1185 = vmatprep.mubr.bf16.mxu0 0
        %1186 = vmatmul.mubr.bf16.gmra.mrb[0].mxu0 %v1092
        %v1187 = vpop.f32.mrb[0].mxu0
        %v1188 = vadd.f32 0.0, %v1187
        %v1189 = vpop.f32.mrb[0].mxu0
        %v1190 = vpop.f32.mrb[0].mxu0
        %v1191 = vadd.f32 0.0, %v1190
        %v1192 = vpop.f32.mrb[0].mxu0
        %1193 = vdwg.mxu0
        %v1194 = vadd.f32 %v1034, %v1132
        %v1195 = vadd.f32 %v1035, %v1135
        %v1196 = vadd.f32 %v1036, %v1140
        %v1197 = vadd.f32 %v1037, %v1143
        %v1198 = vadd.f32 %v1038, %v1148
        %v1199 = vadd.f32 %v1039, %v1151
        %v1200 = vadd.f32 %v1040, %v1156
        %v1201 = vadd.f32 %v1041, %v1159
        %v1202 = vadd.f32 %v1042, %v1164
        %v1203 = vadd.f32 %v1043, %v1167
        %v1204 = vadd.f32 %v1044, %v1172
        %v1205 = vadd.f32 %v1045, %v1175
        %v1206 = vadd.f32 %v1046, %v1180
        %v1207 = vadd.f32 %v1047, %v1183
        %v1208 = vadd.f32 %v1048, %v1188
        %v1209 = vadd.f32 %v1049, %v1191
        %s1210 = scalar_lea.vmem %s1, 12
        %v1211 = vld [vmem:[%s1210] sm:$0x3]
        %v1214 = vunpack.c.l.b16 %v209
        %v1215 = vunpack.c.l.b16 %v210
        %v1216 = vpack.c.b16 %v1214, %v733
        %v1217 = vpack.c.b16 %v1215, %v1215
        %v1218 = vrot.slane %v1216, 2
        %v1219 = vsel %vm1052, %v1066, %v1218
        %v1220 = vrot.slane %v1217, 2
        %v1221 = vsel %vm1052, %v1218, %v1220
        %v1223 = vsel %vm326, %v1219, 0
        %v1226 = vsel %vm326, %v1221, 0
        %v1229 = vsel %vm351, %v1211, 0
        %1231 = vmatprep.subr.bf16.mxu0 0
        %1232 = vmatpush1.bf16.msra.mxu0 %v1229
        %1233 = vmatprep.subr.bf16.mxu0 0
        %1234 = vmatpush1.bf16.msra.mxu0 0
        %1235 = vmatprep.subr.bf16.mxu0 0
        %1236 = vmatpush1.bf16.msra.mxu0 0
        %1237 = vmatprep.subr.bf16.mxu0 0
        %1238 = vmatpush1.bf16.msra.mxu0 0
        %1239 = vmatprep.subr.bf16.mxu0 0
        %1240 = vmatpush1.bf16.msra.mxu0 0
        %1241 = vmatprep.subr.bf16.mxu0 0
        %1242 = vmatpush1.bf16.msra.mxu0 0
        %1243 = vmatprep.subr.bf16.mxu0 0
        %1244 = vmatpush1.bf16.msra.mxu0 0
        %1245 = vmatprep.subr.bf16.mxu0 0
        %1246 = vmatpush1.bf16.msra.mxu0 0
        %1247 = vmatprep.subr.bf16.mxu0 0
        %1248 = vmatpush1.bf16.msra.mxu0 0
        %1249 = vmatprep.subr.bf16.mxu0 0
        %1250 = vmatpush1.bf16.msra.mxu0 0
        %1251 = vmatprep.subr.bf16.mxu0 0
        %1252 = vmatpush1.bf16.msra.mxu0 0
        %1253 = vmatprep.subr.bf16.mxu0 0
        %1254 = vmatpush1.bf16.msra.mxu0 0
        %1255 = vmatprep.subr.bf16.mxu0 0
        %1256 = vmatpush1.bf16.msra.mxu0 0
        %1257 = vmatprep.subr.bf16.mxu0 0
        %1258 = vmatpush1.bf16.msra.mxu0 0
        %1259 = vmatprep.subr.bf16.mxu0 0
        %1260 = vmatpush1.bf16.msra.mxu0 0
        %1261 = vmatprep.subr.bf16.mxu0 0
        %1262 = vmatpush1.bf16.msra.mxu0 0
        %1263 = vmatprep.mubr.bf16.mxu0 0
        %1264 = vmatmul.mubr.bf16.gmra.mrb[0].mxu0 %v1074
        %v1265 = vpop.f32.mrb[0].mxu0
        %v1266 = vadd.f32 0.0, %v1265
        %v1267 = vpop.f32.mrb[0].mxu0
        %v1268 = vpop.f32.mrb[0].mxu0
        %v1269 = vadd.f32 0.0, %v1268
        %v1270 = vpop.f32.mrb[0].mxu0
        %1271 = vmatprep.mubr.bf16.mxu0 0
        %1272 = vmatmul.mubr.bf16.gmra.mrb[0].mxu0 %v1077
        %v1273 = vpop.f32.mrb[0].mxu0
        %v1274 = vadd.f32 0.0, %v1273
        %v1275 = vpop.f32.mrb[0].mxu0
        %v1276 = vpop.f32.mrb[0].mxu0
        %v1277 = vadd.f32 0.0, %v1276
        %v1278 = vpop.f32.mrb[0].mxu0
        %1279 = vmatprep.mubr.bf16.mxu0 0
        %1280 = vmatmul.mubr.bf16.gmra.mrb[0].mxu0 %v1080
        %v1281 = vpop.f32.mrb[0].mxu0
        %v1282 = vadd.f32 0.0, %v1281
        %v1283 = vpop.f32.mrb[0].mxu0
        %v1284 = vpop.f32.mrb[0].mxu0
        %v1285 = vadd.f32 0.0, %v1284
        %v1286 = vpop.f32.mrb[0].mxu0
        %1287 = vmatprep.mubr.bf16.mxu0 0
        %1288 = vmatmul.mubr.bf16.gmra.mrb[0].mxu0 %v1083
        %v1289 = vpop.f32.mrb[0].mxu0
        %v1290 = vadd.f32 0.0, %v1289
        %v1291 = vpop.f32.mrb[0].mxu0
        %v1292 = vpop.f32.mrb[0].mxu0
        %v1293 = vadd.f32 0.0, %v1292
        %v1294 = vpop.f32.mrb[0].mxu0
        %1295 = vmatprep.mubr.bf16.mxu0 0
        %1296 = vmatmul.mubr.bf16.gmra.mrb[0].mxu0 %v1086
        %v1297 = vpop.f32.mrb[0].mxu0
        %v1298 = vadd.f32 0.0, %v1297
        %v1299 = vpop.f32.mrb[0].mxu0
        %v1300 = vpop.f32.mrb[0].mxu0
        %v1301 = vadd.f32 0.0, %v1300
        %v1302 = vpop.f32.mrb[0].mxu0
        %1303 = vmatprep.mubr.bf16.mxu0 0
        %1304 = vmatmul.mubr.bf16.gmra.mrb[0].mxu0 %v1089
        %v1305 = vpop.f32.mrb[0].mxu0
        %v1306 = vadd.f32 0.0, %v1305
        %v1307 = vpop.f32.mrb[0].mxu0
        %v1308 = vpop.f32.mrb[0].mxu0
        %v1309 = vadd.f32 0.0, %v1308
        %v1310 = vpop.f32.mrb[0].mxu0
        %1311 = vmatprep.mubr.bf16.mxu0 0
        %1312 = vmatmul.mubr.bf16.gmra.mrb[0].mxu0 %v1223
        %v1313 = vpop.f32.mrb[0].mxu0
        %v1314 = vadd.f32 0.0, %v1313
        %v1315 = vpop.f32.mrb[0].mxu0
        %v1316 = vpop.f32.mrb[0].mxu0
        %v1317 = vadd.f32 0.0, %v1316
        %v1318 = vpop.f32.mrb[0].mxu0
        %1319 = vmatprep.mubr.bf16.mxu0 0
        %1320 = vmatmul.mubr.bf16.gmra.mrb[0].mxu0 %v1226
        %v1321 = vpop.f32.mrb[0].mxu0
        %v1322 = vadd.f32 0.0, %v1321
        %v1323 = vpop.f32.mrb[0].mxu0
        %v1324 = vpop.f32.mrb[0].mxu0
        %v1325 = vadd.f32 0.0, %v1324
        %v1326 = vpop.f32.mrb[0].mxu0
        %1327 = vdwg.mxu0
        %v1328 = vadd.f32 %v1194, %v1266
        %v1329 = vadd.f32 %v1195, %v1269
        %v1330 = vadd.f32 %v1196, %v1274
        %v1331 = vadd.f32 %v1197, %v1277
        %v1332 = vadd.f32 %v1198, %v1282
        %v1333 = vadd.f32 %v1199, %v1285
        %v1334 = vadd.f32 %v1200, %v1290
        %v1335 = vadd.f32 %v1201, %v1293
        %v1336 = vadd.f32 %v1202, %v1298
        %v1337 = vadd.f32 %v1203, %v1301
        %v1338 = vadd.f32 %v1204, %v1306
        %v1339 = vadd.f32 %v1205, %v1309
        %v1340 = vadd.f32 %v1206, %v1314
        %v1341 = vadd.f32 %v1207, %v1317
        %v1342 = vadd.f32 %v1208, %v1322
        %v1343 = vadd.f32 %v1209, %v1325
        %s1344 = scalar_lea.vmem %s1, 14
        %v1345 = vld [vmem:[%s1344] sm:$0x3]
        %vm1346 = vsmask.f32 5376
        %v1347 = vrot.slane %v278, 2
        %v1348 = vrot.slane %v274, 3
        %v1349 = vor.u32 %v1347, %v1348
        %v1350 = vrot.slane %v286, 2
        %v1351 = vrot.slane %v282, 3
        %v1352 = vor.u32 %v1350, %v1351
        %v1353 = vsel %vm1346, %v1349, %v1352
        %v1354 = vrot.slane %v294, 2
        %v1355 = vrot.slane %v290, 3
        %v1356 = vor.u32 %v1354, %v1355
        %v1357 = vsel %vm1346, %v1352, %v1356
        %v1358 = vrot.slane %v302, 2
        %v1359 = vrot.slane %v298, 3
        %v1360 = vor.u32 %v1358, %v1359
        %v1361 = vsel %vm1346, %v1356, %v1360
        %v1362 = vrot.slane %v310, 2
        %v1363 = vrot.slane %v306, 3
        %v1364 = vor.u32 %v1362, %v1363
        %v1365 = vsel %vm1346, %v1360, %v1364
        %v1366 = vrot.slane %v318, 2
        %v1367 = vrot.slane %v314, 3
        %v1368 = vor.u32 %v1366, %v1367
        %v1369 = vsel %vm1346, %v1364, %v1368
        %v1370 = vrot.slane %v893, 2
        %v1371 = vrot.slane %v896, 3
        %v1372 = vor.u32 %v1370, %v1371
        %v1373 = vsel %vm1346, %v1368, %v1372
        %v1375 = vshrl.u32 %v1216, 16
        %v1377 = vrot.slane %v1375, 2
        %v1378 = vshll.u32 %v1216, 16
        %v1380 = vrot.slane %v1378, 3
        %v1381 = vor.u32 %v1377, %v1380
        %v1382 = vsel %vm1346, %v1372, %v1381
        %v1384 = vshrl.u32 %v1217, 16
        %v1386 = vrot.slane %v1384, 2
        %v1387 = vshll.u32 %v1217, 16
        %v1389 = vrot.slane %v1387, 3
        %v1390 = vor.u32 %v1386, %v1389
        %v1391 = vsel %vm1346, %v1381, %v1390
        %v1393 = vsel %vm326, %v1353, 0
        %v1396 = vsel %vm326, %v1357, 0
        %v1399 = vsel %vm326, %v1361, 0
        %v1402 = vsel %vm326, %v1365, 0
        %v1405 = vsel %vm326, %v1369, 0
        %v1408 = vsel %vm326, %v1373, 0
        %v1411 = vsel %vm326, %v1382, 0
        %v1414 = vsel %vm326, %v1391, 0
        %v1417 = vsel %vm351, %v1345, 0
        %1419 = vmatprep.subr.bf16.mxu0 0
        %1420 = vmatpush1.bf16.msra.mxu0 %v1417
        %1421 = vmatprep.subr.bf16.mxu0 0
        %1422 = vmatpush1.bf16.msra.mxu0 0
        %1423 = vmatprep.subr.bf16.mxu0 0
        %1424 = vmatpush1.bf16.msra.mxu0 0
        %1425 = vmatprep.subr.bf16.mxu0 0
        %1426 = vmatpush1.bf16.msra.mxu0 0
        %1427 = vmatprep.subr.bf16.mxu0 0
        %1428 = vmatpush1.bf16.msra.mxu0 0
        %1429 = vmatprep.subr.bf16.mxu0 0
        %1430 = vmatpush1.bf16.msra.mxu0 0
        %1431 = vmatprep.subr.bf16.mxu0 0
        %1432 = vmatpush1.bf16.msra.mxu0 0
        %1433 = vmatprep.subr.bf16.mxu0 0
        %1434 = vmatpush1.bf16.msra.mxu0 0
        %1435 = vmatprep.subr.bf16.mxu0 0
        %1436 = vmatpush1.bf16.msra.mxu0 0
        %1437 = vmatprep.subr.bf16.mxu0 0
        %1438 = vmatpush1.bf16.msra.mxu0 0
        %1439 = vmatprep.subr.bf16.mxu0 0
        %1440 = vmatpush1.bf16.msra.mxu0 0
        %1441 = vmatprep.subr.bf16.mxu0 0
        %1442 = vmatpush1.bf16.msra.mxu0 0
        %1443 = vmatprep.subr.bf16.mxu0 0
        %1444 = vmatpush1.bf16.msra.mxu0 0
        %1445 = vmatprep.subr.bf16.mxu0 0
        %1446 = vmatpush1.bf16.msra.mxu0 0
        %1447 = vmatprep.subr.bf16.mxu0 0
        %1448 = vmatpush1.bf16.msra.mxu0 0
        %1449 = vmatprep.subr.bf16.mxu0 0
        %1450 = vmatpush1.bf16.msra.mxu0 0
        %1451 = vmatprep.mubr.bf16.mxu0 0
        %1452 = vmatmul.mubr.bf16.gmra.mrb[0].mxu0 %v1393
        %v1453 = vpop.f32.mrb[0].mxu0
        %v1454 = vadd.f32 0.0, %v1453
        %v1455 = vpop.f32.mrb[0].mxu0
        %v1456 = vpop.f32.mrb[0].mxu0
        %v1457 = vadd.f32 0.0, %v1456
        %v1458 = vpop.f32.mrb[0].mxu0
        %1459 = vmatprep.mubr.bf16.mxu0 0
        %1460 = vmatmul.mubr.bf16.gmra.mrb[0].mxu0 %v1396
        %v1461 = vpop.f32.mrb[0].mxu0
        %v1462 = vadd.f32 0.0, %v1461
        %v1463 = vpop.f32.mrb[0].mxu0
        %v1464 = vpop.f32.mrb[0].mxu0
        %v1465 = vadd.f32 0.0, %v1464
        %v1466 = vpop.f32.mrb[0].mxu0
        %1467 = vmatprep.mubr.bf16.mxu0 0
        %1468 = vmatmul.mubr.bf16.gmra.mrb[0].mxu0 %v1399
        %v1469 = vpop.f32.mrb[0].mxu0
        %v1470 = vadd.f32 0.0, %v1469
        %v1471 = vpop.f32.mrb[0].mxu0
        %v1472 = vpop.f32.mrb[0].mxu0
        %v1473 = vadd.f32 0.0, %v1472
        %v1474 = vpop.f32.mrb[0].mxu0
        %1475 = vmatprep.mubr.bf16.mxu0 0
        %1476 = vmatmul.mubr.bf16.gmra.mrb[0].mxu0 %v1402
        %v1477 = vpop.f32.mrb[0].mxu0
        %v1478 = vadd.f32 0.0, %v1477
        %v1479 = vpop.f32.mrb[0].mxu0
        %v1480 = vpop.f32.mrb[0].mxu0
        %v1481 = vadd.f32 0.0, %v1480
        %v1482 = vpop.f32.mrb[0].mxu0
        %1483 = vmatprep.mubr.bf16.mxu0 0
        %1484 = vmatmul.mubr.bf16.gmra.mrb[0].mxu0 %v1405
        %v1485 = vpop.f32.mrb[0].mxu0
        %v1486 = vadd.f32 0.0, %v1485
        %v1487 = vpop.f32.mrb[0].mxu0
        %v1488 = vpop.f32.mrb[0].mxu0
        %v1489 = vadd.f32 0.0, %v1488
        %v1490 = vpop.f32.mrb[0].mxu0
        %1491 = vmatprep.mubr.bf16.mxu0 0
        %1492 = vmatmul.mubr.bf16.gmra.mrb[0].mxu0 %v1408
        %v1493 = vpop.f32.mrb[0].mxu0
        %v1494 = vadd.f32 0.0, %v1493
        %v1495 = vpop.f32.mrb[0].mxu0
        %v1496 = vpop.f32.mrb[0].mxu0
        %v1497 = vadd.f32 0.0, %v1496
        %v1498 = vpop.f32.mrb[0].mxu0
        %1499 = vmatprep.mubr.bf16.mxu0 0
        %1500 = vmatmul.mubr.bf16.gmra.mrb[0].mxu0 %v1411
        %v1501 = vpop.f32.mrb[0].mxu0
        %v1502 = vadd.f32 0.0, %v1501
        %v1503 = vpop.f32.mrb[0].mxu0
        %v1504 = vpop.f32.mrb[0].mxu0
        %v1505 = vadd.f32 0.0, %v1504
        %v1506 = vpop.f32.mrb[0].mxu0
        %1507 = vmatprep.mubr.bf16.mxu0 0
        %1508 = vmatmul.mubr.bf16.gmra.mrb[0].mxu0 %v1414
        %v1509 = vpop.f32.mrb[0].mxu0
        %v1510 = vadd.f32 0.0, %v1509
        %v1511 = vpop.f32.mrb[0].mxu0
        %v1512 = vpop.f32.mrb[0].mxu0
        %v1513 = vadd.f32 0.0, %v1512
        %v1514 = vpop.f32.mrb[0].mxu0
        %1515 = vdwg.mxu0
        %v1516 = vadd.f32 %v1328, %v1454
        %v1517 = vadd.f32 %v1329, %v1457
        %v1518 = vadd.f32 %v1330, %v1462
        %v1519 = vadd.f32 %v1331, %v1465
        %v1520 = vadd.f32 %v1332, %v1470
        %v1521 = vadd.f32 %v1333, %v1473
        %v1522 = vadd.f32 %v1334, %v1478
        %v1523 = vadd.f32 %v1335, %v1481
        %v1524 = vadd.f32 %v1336, %v1486
        %v1525 = vadd.f32 %v1337, %v1489
        %v1526 = vadd.f32 %v1338, %v1494
        %v1527 = vadd.f32 %v1339, %v1497
        %v1528 = vadd.f32 %v1340, %v1502
        %v1529 = vadd.f32 %v1341, %v1505
        %v1530 = vadd.f32 %v1342, %v1510
        %v1531 = vadd.f32 %v1343, %v1513
        %s1532 = scalar_lea.vmem %s1, 16
        %v1533 = vld [vmem:[%s1532] sm:$0x3]
        %vm1534 = vcmask 1044480
        %v1535 = vrot.slane %v250, 3
        %v1536 = vrot.slane %v251, 3
        %v1537 = vsel %vm1534, %v1535, %v1536
        %v1538 = vrot.slane %v252, 3
        %v1539 = vsel %vm1534, %v1536, %v1538
        %v1540 = vrot.slane %v253, 3
        %v1541 = vsel %vm1534, %v1538, %v1540
        %v1542 = vrot.slane %v254, 3
        %v1543 = vsel %vm1534, %v1540, %v1542
        %v1544 = vrot.slane %v255, 3
        %v1545 = vsel %vm1534, %v1542, %v1544
        %v1546 = vrot.slane %v734, 3
        %v1547 = vsel %vm1534, %v1544, %v1546
        %v1548 = vrot.slane %v1216, 3
        %v1549 = vsel %vm1534, %v1546, %v1548
        %v1550 = vrot.slane %v1217, 3
        %v1551 = vsel %vm1534, %v1548, %v1550
        %v1553 = vsel %vm326, %v1537, 0
        %v1556 = vsel %vm326, %v1539, 0
        %v1559 = vsel %vm326, %v1541, 0
        %v1562 = vsel %vm326, %v1543, 0
        %v1565 = vsel %vm326, %v1545, 0
        %v1568 = vsel %vm326, %v1547, 0
        %v1571 = vsel %vm326, %v1549, 0
        %v1574 = vsel %vm326, %v1551, 0
        %v1577 = vsel %vm351, %v1533, 0
        %1579 = vmatprep.subr.bf16.mxu0 0
        %1580 = vmatpush1.bf16.msra.mxu0 %v1577
        %1581 = vmatprep.subr.bf16.mxu0 0
        %1582 = vmatpush1.bf16.msra.mxu0 0
        %1583 = vmatprep.subr.bf16.mxu0 0
        %1584 = vmatpush1.bf16.msra.mxu0 0
        %1585 = vmatprep.subr.bf16.mxu0 0
        %1586 = vmatpush1.bf16.msra.mxu0 0
        %1587 = vmatprep.subr.bf16.mxu0 0
        %1588 = vmatpush1.bf16.msra.mxu0 0
        %1589 = vmatprep.subr.bf16.mxu0 0
        %1590 = vmatpush1.bf16.msra.mxu0 0
        %1591 = vmatprep.subr.bf16.mxu0 0
        %1592 = vmatpush1.bf16.msra.mxu0 0
        %1593 = vmatprep.subr.bf16.mxu0 0
        %1594 = vmatpush1.bf16.msra.mxu0 0
        %1595 = vmatprep.subr.bf16.mxu0 0
        %1596 = vmatpush1.bf16.msra.mxu0 0
        %1597 = vmatprep.subr.bf16.mxu0 0
        %1598 = vmatpush1.bf16.msra.mxu0 0
        %1599 = vmatprep.subr.bf16.mxu0 0
        %1600 = vmatpush1.bf16.msra.mxu0 0
        %1601 = vmatprep.subr.bf16.mxu0 0
        %1602 = vmatpush1.bf16.msra.mxu0 0
        %1603 = vmatprep.subr.bf16.mxu0 0
        %1604 = vmatpush1.bf16.msra.mxu0 0
        %1605 = vmatprep.subr.bf16.mxu0 0
        %1606 = vmatpush1.bf16.msra.mxu0 0
        %1607 = vmatprep.subr.bf16.mxu0 0
        %1608 = vmatpush1.bf16.msra.mxu0 0
        %1609 = vmatprep.subr.bf16.mxu0 0
        %1610 = vmatpush1.bf16.msra.mxu0 0
        %1611 = vmatprep.mubr.bf16.mxu0 0
        %1612 = vmatmul.mubr.bf16.gmra.mrb[0].mxu0 %v1553
        %v1613 = vpop.f32.mrb[0].mxu0
        %v1614 = vadd.f32 0.0, %v1613
        %v1615 = vpop.f32.mrb[0].mxu0
        %v1616 = vpop.f32.mrb[0].mxu0
        %v1617 = vadd.f32 0.0, %v1616
        %v1618 = vpop.f32.mrb[0].mxu0
        %1619 = vmatprep.mubr.bf16.mxu0 0
        %1620 = vmatmul.mubr.bf16.gmra.mrb[0].mxu0 %v1556
        %v1621 = vpop.f32.mrb[0].mxu0
        %v1622 = vadd.f32 0.0, %v1621
        %v1623 = vpop.f32.mrb[0].mxu0
        %v1624 = vpop.f32.mrb[0].mxu0
        %v1625 = vadd.f32 0.0, %v1624
        %v1626 = vpop.f32.mrb[0].mxu0
        %1627 = vmatprep.mubr.bf16.mxu0 0
        %1628 = vmatmul.mubr.bf16.gmra.mrb[0].mxu0 %v1559
        %v1629 = vpop.f32.mrb[0].mxu0
        %v1630 = vadd.f32 0.0, %v1629
        %v1631 = vpop.f32.mrb[0].mxu0
        %v1632 = vpop.f32.mrb[0].mxu0
        %v1633 = vadd.f32 0.0, %v1632
        %v1634 = vpop.f32.mrb[0].mxu0
        %1635 = vmatprep.mubr.bf16.mxu0 0
        %1636 = vmatmul.mubr.bf16.gmra.mrb[0].mxu0 %v1562
        %v1637 = vpop.f32.mrb[0].mxu0
        %v1638 = vadd.f32 0.0, %v1637
        %v1639 = vpop.f32.mrb[0].mxu0
        %v1640 = vpop.f32.mrb[0].mxu0
        %v1641 = vadd.f32 0.0, %v1640
        %v1642 = vpop.f32.mrb[0].mxu0
        %1643 = vmatprep.mubr.bf16.mxu0 0
        %1644 = vmatmul.mubr.bf16.gmra.mrb[0].mxu0 %v1565
        %v1645 = vpop.f32.mrb[0].mxu0
        %v1646 = vadd.f32 0.0, %v1645
        %v1647 = vpop.f32.mrb[0].mxu0
        %v1648 = vpop.f32.mrb[0].mxu0
        %v1649 = vadd.f32 0.0, %v1648
        %v1650 = vpop.f32.mrb[0].mxu0
        %1651 = vmatprep.mubr.bf16.mxu0 0
        %1652 = vmatmul.mubr.bf16.gmra.mrb[0].mxu0 %v1568
        %v1653 = vpop.f32.mrb[0].mxu0
        %v1654 = vadd.f32 0.0, %v1653
        %v1655 = vpop.f32.mrb[0].mxu0
        %v1656 = vpop.f32.mrb[0].mxu0
        %v1657 = vadd.f32 0.0, %v1656
        %v1658 = vpop.f32.mrb[0].mxu0
        %1659 = vmatprep.mubr.bf16.mxu0 0
        %1660 = vmatmul.mubr.bf16.gmra.mrb[0].mxu0 %v1571
        %v1661 = vpop.f32.mrb[0].mxu0
        %v1662 = vadd.f32 0.0, %v1661
        %v1663 = vpop.f32.mrb[0].mxu0
        %v1664 = vpop.f32.mrb[0].mxu0
        %v1665 = vadd.f32 0.0, %v1664
        %v1666 = vpop.f32.mrb[0].mxu0
        %1667 = vmatprep.mubr.bf16.mxu0 0
        %1668 = vmatmul.mubr.bf16.gmra.mrb[0].mxu0 %v1574
        %v1669 = vpop.f32.mrb[0].mxu0
        %v1670 = vadd.f32 0.0, %v1669
        %v1671 = vpop.f32.mrb[0].mxu0
        %v1672 = vpop.f32.mrb[0].mxu0
        %v1673 = vadd.f32 0.0, %v1672
        %v1674 = vpop.f32.mrb[0].mxu0
        %1675 = vdwg.mxu0
        %v1676 = vadd.f32 %v1516, %v1614
        %v1677 = vadd.f32 %v1517, %v1617
        %v1678 = vadd.f32 %v1518, %v1622
        %v1679 = vadd.f32 %v1519, %v1625
        %v1680 = vadd.f32 %v1520, %v1630
        %v1681 = vadd.f32 %v1521, %v1633
        %v1682 = vadd.f32 %v1522, %v1638
        %v1683 = vadd.f32 %v1523, %v1641
        %v1684 = vadd.f32 %v1524, %v1646
        %v1685 = vadd.f32 %v1525, %v1649
        %v1686 = vadd.f32 %v1526, %v1654
        %v1687 = vadd.f32 %v1527, %v1657
        %v1688 = vadd.f32 %v1528, %v1662
        %v1689 = vadd.f32 %v1529, %v1665
        %v1690 = vadd.f32 %v1530, %v1670
        %v1691 = vadd.f32 %v1531, %v1673
        %v1692 = vld [vmem:[%s2] sm:$0x1]
        %v1694 = vlaneseq
        %v1695 = vshrl.u32 %v1694, 7
        %v1696 = vsub.s32 0, %v1695
        %v1697 = vrot.slane %v1692, %v1696
        %v1699 = vadd.f32 %v1676, %v1697
        %v1700 = vadd.f32 %v1677, %v1697
        %v1701 = vadd.f32 %v1678, %v1697
        %v1702 = vadd.f32 %v1679, %v1697
        %v1703 = vadd.f32 %v1680, %v1697
        %v1704 = vadd.f32 %v1681, %v1697
        %v1705 = vadd.f32 %v1682, %v1697
        %v1706 = vadd.f32 %v1683, %v1697
        %v1707 = vadd.f32 %v1684, %v1697
        %v1708 = vadd.f32 %v1685, %v1697
        %v1709 = vadd.f32 %v1686, %v1697
        %v1710 = vadd.f32 %v1687, %v1697
        %v1711 = vadd.f32 %v1688, %v1697
        %v1712 = vadd.f32 %v1689, %v1697
        %v1713 = vadd.f32 %v1690, %v1697
        %v1714 = vadd.f32 %v1691, %v1697
        %1715 = vst [vmem:[%s177] sm:$0xff] %v1699
        %1716 = vst [vmem:[%s177 + $0x8] sm:$0xff] %v1700
        %1717 = vst [vmem:[%s177 + $0x10] sm:$0xff] %v1701
        %1718 = vst [vmem:[%s177 + $0x18] sm:$0xff] %v1702
        %1719 = vst [vmem:[%s177 + $0x20] sm:$0xff] %v1703
        %1720 = vst [vmem:[%s177 + $0x28] sm:$0xff] %v1704
        %1721 = vst [vmem:[%s177 + $0x30] sm:$0xff] %v1705
        %1722 = vst [vmem:[%s177 + $0x38] sm:$0xff] %v1706
        %1723 = vst [vmem:[%s177 + $0x40] sm:$0xff] %v1707
        %1724 = vst [vmem:[%s177 + $0x48] sm:$0xff] %v1708
        %1725 = vst [vmem:[%s177 + $0x50] sm:$0xff] %v1709
        %1726 = vst [vmem:[%s177 + $0x58] sm:$0xff] %v1710
        %1727 = vst [vmem:[%s177 + $0x60] sm:$0xff] %v1711
        %1728 = vst [vmem:[%s177 + $0x68] sm:$0xff] %v1712
        %1729 = vst [vmem:[%s177 + $0x70] sm:$0xff] %v1713
        %1730 = vst [vmem:[%s177 + $0x78] sm:$0xff] %v1714
        %s1731 = sand.u32 %s107, 1
        %s1732 = scalar_lea.sflag [#allocation3], %s1731
        %s1733 = sand.u32 %s107, 1
        %s1734 = smul.addr %s1733, 128
        %s1735 = scalar_lea.vmem [#allocation2], %s1734
        // Predicated region
        $region33: #{tpu_custom_call.1} parent=31 // pred_check
          %p1736 = pneg %p117
        $region34: #{tpu_custom_call.1} parent=31 // pred_check_branch
          %1738 = sbr.rel (%p1736) target = $region36
        $region35: #{tpu_custom_call.1} parent=31 // pred_region
          %s1739 = smul.u32 16, %s22
          %s1741 = ssub.s32 2048, 2048
          %1742 = vsyncadd %s1732, %s1741
          %s1743 = smul.addr %s21, 48
          %s1744 = sadd.s32 %s1739, %s1743
          %s1745 = smul.addr %s1744, 128
          %s1746 = scalar_lea.hbm %s3, %s1745
          %s1747 = sshll.u32 %s1735, 4
          %s1748 = int_to_ptr.vmem [resolvable:$true] %s1747
          %1753 = dma.vmem_to_hbm [thread:$0]  %s1748, 2048, %s1746, %s1732, 128, 128, 8
        $region36: #{tpu_custom_call.1} parent=31 // pred_fallthru
          _
      $region32: #{tpu_custom_call.1} parent=5 // pred_fallthru
        _
      %p1754 = scmp.le.s32.totalorder 2, %s12
      // Predicated region
      $region37: #{tpu_custom_call.1} parent=5 // pred_check
        %p1755 = pneg %p1754
      $region38: #{tpu_custom_call.1} parent=5 // pred_check_branch
        %1757 = sbr.rel (%p1755) target = $region40
      $region39: #{tpu_custom_call.1} parent=5 // pred_region
        %s1758 = ssub.s32 %s12, 2
        // Predicated region
        $region41: #{tpu_custom_call.1} parent=39 // pred_check
          %p1759 = pneg %p123
        $region42: #{tpu_custom_call.1} parent=39 // pred_check_branch
          %1761 = sbr.rel (%p1759) target = $region44
        $region43: #{tpu_custom_call.1} parent=39 // pred_region
          %s1762 = sand.u32 %s108, 1
          %s1763 = scalar_lea.sflag [#allocation3], %s1762
          %s1764 = sand.u32 %s108, 1
          %s1765 = smul.addr %s1764, 128
          %s1766 = scalar_lea.vmem [#allocation2], %s1765
          %1767 = dma.done %s1763, 2048
        $region44: #{tpu_custom_call.1} parent=39 // pred_fallthru
          _
      $region40: #{tpu_custom_call.1} parent=5 // pred_fallthru
        _
    $region6: #{tpu_custom_call.1} parent=1 // loop_footer
      %s16 = sadd.s32 1, %s12
    $region7: #{tpu_custom_call.1} parent=1 // loop_footer_branch
      %11 = sbr.rel target = $region3
    $region8: #{tpu_custom_call.1} parent=1 // loop_exit
      _
    %1768 = vsyncpa [#allocation3], 1
    %s1769 = scalar_lea.sflag [#allocation3], 1
    %1770 = vsyncpa %s1769, 1

</llo_original>
